<compile_context>
chip_gen: v6e
topology: v6e:2x2x1
jax: 0.10.0
libtpu: 0.0.40
codegen_flags: <defaults>
</compile_context>

<pallas_src>
import functools

import jax
import jax.numpy as jnp
from jax import lax
from jax.experimental import pallas as pl
from jax.experimental.pallas import tpu as pltpu


def _round_up(x, m):
    return ((x + m - 1) // m) * m


def _resblock_stack_kernel(x_ref, w1_ref, w2_ref, b_ref, o_ref, *, sub):
    """Apply all L ResBlocks to one VMEM-resident (C, TB) activation tile.

    x_ref : (C, TB)       activation tile (bf16/f32), lane-dense time axis
    w*_ref: (L, C, C)     BN-scale-folded 1x1 conv weights (bf16)
    b_ref : (L, 2, C, 1)  folded BN shifts (f32): [l,0]=after conv1, [l,1]=after conv2
    o_ref : (C, TB)

    The TB tile is walked in `sub`-lane sub-chunks so the f32 residual carry
    plus per-layer intermediates never exceed a few vregs even for large DMA
    tiles (big DMA tile != big live register set).
    """
    compute_dtype = w1_ref.dtype
    n_blocks = w1_ref.shape[0]
    n_sub = x_ref.shape[-1] // sub

    def body(s, carry):
        start = pl.multiple_of(s * sub, sub)
        # Residual carry in f32 (safe on v5e: no bf16 VALU/EUP there).
        x = x_ref[:, pl.ds(start, sub)].astype(jnp.float32)
        for l in range(n_blocks):  # static unroll; L is small
            h = jnp.dot(w1_ref[l], x.astype(compute_dtype),
                        preferred_element_type=jnp.float32)
            h = jnp.maximum(h + b_ref[l, 0], 0.0)        # BN shift + ReLU
            h = jnp.dot(w2_ref[l], h.astype(compute_dtype),
                        preferred_element_type=jnp.float32)
            x = x + (h + b_ref[l, 1])                    # BN shift + residual
        o_ref[:, pl.ds(start, sub)] = x.astype(o_ref.dtype)
        return carry

    lax.fori_loop(0, n_sub, body, 0, unroll=True)


def fused_resblock_stack(x, w1s, w2s, scale1s, shift1s, scale2s, shift2s, *,
                         t_block=1024, compute_dtype=jnp.bfloat16):
    """Apply L fused ResBlocks.

    x:       (N, C, T)   activations (any float dtype; bf16 recommended)
    w1s/w2s: (L, C, C)   1x1 conv weights per block
    scale*s/shift*s: (L, C) folded BatchNorm scale/shift per block
    Returns (N, C, T) in x.dtype.
    """
    N, C, T = x.shape
    L = w1s.shape[0]

    # Fold the BN scale into the conv weights once (exact: diag(scale) @ W).
    w1f = (scale1s[:, :, None] * w1s).astype(compute_dtype)
    w2f = (scale2s[:, :, None] * w2s).astype(compute_dtype)
    # Merge both shift stacks into a single constant operand (fewer streams).
    b = jnp.stack([shift1s, shift2s], axis=1).reshape(L, 2, C, 1).astype(jnp.float32)

    # ---- time-tile selection (lane-dense, multiples of 128, no wrapper pad) ----
    if T % 128 == 0:
        tb = min(_round_up(t_block, 128), T)
    elif T > 128:
        tb = min(_round_up(t_block, 128), (T // 128) * 128)  # partial tail chunk
    else:
        tb = T  # block equals full time extent (allowed, no 128 constraint)
    grid_t = pl.cdiv(T, tb)
    if N * grid_t < 2 and T > 128:
        # Guarantee >=2 parallel grid steps so v7x's 2 TensorCores both work.
        tb = max(128, _round_up(pl.cdiv(T, 2), 128))
        grid_t = pl.cdiv(T, tb)

    # In-register sub-chunk width (bounds vreg pressure of the unrolled L loop).
    sub = next((s for s in (512, 256, 128) if tb % s == 0), tb)

    # ---- explicit VMEM budget (one code path on v7x 64 MiB / v5e-v6e 128 MiB) ----
    itemsize = jnp.dtype(x.dtype).itemsize
    w_itemsize = jnp.dtype(compute_dtype).itemsize
    act_bytes = 2 * 2 * C * tb * itemsize                                  # in+out, 2-buf
    w_bytes = 2 * 2 * L * _round_up(C, 16) * _round_up(C, 128) * w_itemsize
    b_bytes = 2 * L * 2 * _round_up(C, 8) * 128 * 4                        # lane-padded
    scratch_bytes = 6 * C * sub * 4                                        # f32 carries
    need = int(1.5 * (act_bytes + w_bytes + b_bytes + scratch_bytes)) + (4 << 20)
    try:
        vmem_cap = pltpu.get_tpu_info().vmem_capacity_bytes
    except Exception:
        vmem_cap = 64 * 1024 * 1024  # conservative (v7x per-core VMEM)
    vmem_limit = int(min(max(need, 32 << 20), vmem_cap * 3 // 4))

    cost = pl.CostEstimate(
        flops=4 * L * C * C * N * T,
        transcendentals=0,
        bytes_accessed=N * C * T * 2 * itemsize + 2 * L * C * C * w_itemsize
                       + 2 * L * C * 4)

    kernel = functools.partial(_resblock_stack_kernel, sub=sub)

    def make_call(single_buffer_consts):
        # Constant operands never change across grid steps; single-buffer them
        # so default double-buffering doesn't waste VMEM.
        const_kw = {"pipeline_mode": pl.Buffered(1)} if single_buffer_consts else {}
        return pl.pallas_call(
            kernel,
            out_shape=jax.ShapeDtypeStruct((N, C, T), x.dtype),
            grid_spec=pltpu.PrefetchScalarGridSpec(
                num_scalar_prefetch=0,
                grid=(N, grid_t),
                in_specs=[
                    pl.BlockSpec((pl.Squeezed(), C, tb), lambda n, t: (n, 0, t)),
                    pl.BlockSpec((L, C, C), lambda n, t: (0, 0, 0), **const_kw),
                    pl.BlockSpec((L, C, C), lambda n, t: (0, 0, 0), **const_kw),
                    pl.BlockSpec((L, 2, C, 1), lambda n, t: (0, 0, 0, 0), **const_kw),
                ],
                out_specs=pl.BlockSpec((pl.Squeezed(), C, tb), lambda n, t: (n, 0, t)),
            ),
            compiler_params=pltpu.CompilerParams(
                dimension_semantics=("parallel", "parallel"),
                vmem_limit_bytes=vmem_limit,
            ),
            cost_estimate=cost,
        )

    try:
        return make_call(True)(x, w1f, w2f, b)
    except Exception:
        # pl.Buffered(1) rejected on this jax/Mosaic version -> default buffering.
        return make_call(False)(x, w1f, w2f, b)


def resblock_stack_reference_f32(x, w1s, w2s, scale1s, shift1s, scale2s, shift2s):
    """Pure-f32 plain-JAX reference matching the PyTorch forward semantics."""
    h = x.astype(jnp.float32)
    for l in range(w1s.shape[0]):
        a = jnp.einsum("oc,nct->not", w1s[l], h)
        a = a * scale1s[l][None, :, None] + shift1s[l][None, :, None]
        a = jnp.maximum(a, 0.0)
        a = jnp.einsum("oc,nct->not", w2s[l], a)
        a = a * scale2s[l][None, :, None] + shift2s[l][None, :, None]
        h = h + a
    return h


def resblock_stack_reference_matched(x, w1s, w2s, scale1s, shift1s, scale2s,
                                     shift2s, compute_dtype=jnp.bfloat16):
    """Reference with the same bf16-matmul / f32-accumulate numerics as the kernel."""
    w1f = (scale1s[:, :, None] * w1s).astype(compute_dtype)
    w2f = (scale2s[:, :, None] * w2s).astype(compute_dtype)
    h = x.astype(jnp.float32)
    for l in range(w1s.shape[0]):
        a = jnp.einsum("oc,nct->not", w1f[l], h.astype(compute_dtype),
                       preferred_element_type=jnp.float32)
        a = jnp.maximum(a + shift1s[l][None, :, None], 0.0)
        a = jnp.einsum("oc,nct->not", w2f[l], a.astype(compute_dtype),
                       preferred_element_type=jnp.float32)
        h = h + (a + shift2s[l][None, :, None])
    return h


if __name__ == "__main__":
    # Small shapes consistent with MelResNet: `compute_dims` channels, a few
    # stacked ResBlocks, a time axis that exercises the partial tail chunk.
    N, C, T, L = 2, 32, 160, 3
    eps = 1e-5

    key = jax.random.PRNGKey(0)
    (kx, kw1, kw2, kg1, kb1, km1, kv1, kg2, kb2, km2, kv2) = jax.random.split(key, 11)

    x = jax.random.normal(kx, (N, C, T), dtype=jnp.float32)

    # Conv1d(dims, dims, kernel_size=1, bias=False) weights per block.
    w1s = jax.random.normal(kw1, (L, C, C), dtype=jnp.float32) * 0.1
    w2s = jax.random.normal(kw2, (L, C, C), dtype=jnp.float32) * 0.1

    # BatchNorm1d parameters (eval mode with synthetic running stats), per block.
    gamma1 = 1.0 + 0.1 * jax.random.normal(kg1, (L, C), dtype=jnp.float32)
    beta1 = 0.1 * jax.random.normal(kb1, (L, C), dtype=jnp.float32)
    mean1 = 0.1 * jax.random.normal(km1, (L, C), dtype=jnp.float32)
    var1 = jnp.abs(jax.random.normal(kv1, (L, C), dtype=jnp.float32)) + 0.5

    gamma2 = 1.0 + 0.1 * jax.random.normal(kg2, (L, C), dtype=jnp.float32)
    beta2 = 0.1 * jax.random.normal(kb2, (L, C), dtype=jnp.float32)
    mean2 = 0.1 * jax.random.normal(km2, (L, C), dtype=jnp.float32)
    var2 = jnp.abs(jax.random.normal(kv2, (L, C), dtype=jnp.float32)) + 0.5

    # Fold BN into per-channel scale/shift (eval mode).
    scale1s = gamma1 / jnp.sqrt(var1 + eps)
    shift1s = beta1 - mean1 * scale1s
    scale2s = gamma2 / jnp.sqrt(var2 + eps)
    shift2s = beta2 - mean2 * scale2s

    # bf16 activations in HBM; residual math stays f32 in-kernel.
    x_bf16 = x.astype(jnp.bfloat16)

    out = fused_resblock_stack(
        x_bf16, w1s, w2s, scale1s, shift1s, scale2s, shift2s,
        compute_dtype=jnp.bfloat16)
    out = jax.block_until_ready(out)
    assert out.shape == (N, C, T)

    out_f32 = out.astype(jnp.float32)

    # Check against a reference with matching (bf16 matmul, f32 acc, bf16 store).
    ref_matched = resblock_stack_reference_matched(
        x_bf16, w1s, w2s, scale1s, shift1s, scale2s, shift2s)
    ref_matched = ref_matched.astype(jnp.bfloat16).astype(jnp.float32)
    assert jnp.allclose(out_f32, ref_matched, atol=2e-2, rtol=2e-2), \
        "mismatch vs bf16-matched reference"

    # Sanity check against the pure-f32 PyTorch-semantics reference.
    ref_f32 = resblock_stack_reference_f32(
        x, w1s, w2s, scale1s, shift1s, scale2s, shift2s)
    assert jnp.allclose(out_f32, ref_f32, atol=1e-1, rtol=1e-1), \
        "mismatch vs f32 reference"

    print("KERNEL_OK")
</pallas_src>

<mosaic_0001>
module attributes {stable_mosaic.version = 11 : i64} {
  func.func @_resblock_stack_kernel(%arg0: i32, %arg1: i32, %arg2: memref<1x32x128xbf16, #tpu.memory_space<vmem>>, %arg3: memref<3x32x32xbf16, #tpu.memory_space<vmem>>, %arg4: memref<3x32x32xbf16, #tpu.memory_space<vmem>>, %arg5: memref<3x2x32x1xf32, #tpu.memory_space<vmem>>, %arg6: memref<1x32x128xbf16, #tpu.memory_space<vmem>>) attributes {dimension_semantics = [#tpu.dimension_semantics<parallel>, #tpu.dimension_semantics<parallel>], iteration_bounds = array<i64: 2, 2>, scalar_prefetch = 0 : i64, scratch_operands = 0 : i64, tpu.core_type = #tpu.core_type<tc>, window_params = [{transform_indices = @transform_0, window_bounds = array<i64: 1, 32, 128>}, {pipeline_mode = #tpu.pipeline_mode<synchronous>, transform_indices = @transform_1, window_bounds = array<i64: 3, 32, 32>}, {pipeline_mode = #tpu.pipeline_mode<synchronous>, transform_indices = @transform_2, window_bounds = array<i64: 3, 32, 32>}, {pipeline_mode = #tpu.pipeline_mode<synchronous>, transform_indices = @transform_3, window_bounds = array<i64: 3, 2, 32, 1>}, {transform_indices = @transform_4, window_bounds = array<i64: 1, 32, 128>}]} {
    %c0_i32 = arith.constant 0 : i32
    %c128_i32 = arith.constant 128 : i32
    %0 = arith.muli %c0_i32, %c128_i32 : i32
    %1 = tpu.assume_multiple %0, 128 : i32
    %c0 = arith.constant 0 : index
    %c0_0 = arith.constant 0 : index
    %2 = arith.index_cast %1 : i32 to index
    %3 = vector.load %arg2[%c0, %c0_0, %2] : memref<1x32x128xbf16, #tpu.memory_space<vmem>>, vector<1x32x128xbf16>
    %4 = vector.shape_cast %3 : vector<1x32x128xbf16> to vector<32x128xbf16>
    %5 = arith.extf %4 : vector<32x128xbf16> to vector<32x128xf32>
    %c0_1 = arith.constant 0 : index
    %c0_2 = arith.constant 0 : index
    %c0_3 = arith.constant 0 : index
    %6 = vector.load %arg3[%c0_1, %c0_2, %c0_3] : memref<3x32x32xbf16, #tpu.memory_space<vmem>>, vector<1x32x32xbf16>
    %7 = vector.shape_cast %6 : vector<1x32x32xbf16> to vector<32x32xbf16>
    %8 = arith.truncf %5 : vector<32x128xf32> to vector<32x128xbf16>
    %cst = arith.constant dense<0.000000e+00> : vector<32x128xf32>
    %9 = tpu.matmul %7, %8, %cst {dimension_numbers = #tpu.dot_dimension_numbers<[1], [0], [0], [1], [0, 0, 1, 1], [], []>} : vector<32x32xbf16>, vector<32x128xbf16>, vector<32x128xf32> -> vector<32x128xf32>
    %c0_4 = arith.constant 0 : index
    %c0_5 = arith.constant 0 : index
    %c0_6 = arith.constant 0 : index
    %c0_7 = arith.constant 0 : index
    %10 = vector.load %arg5[%c0_4, %c0_5, %c0_6, %c0_7] : memref<3x2x32x1xf32, #tpu.memory_space<vmem>>, vector<1x1x32x1xf32>
    %11 = vector.shape_cast %10 : vector<1x1x32x1xf32> to vector<32x1xf32>
    %12 = vector.broadcast %11 : vector<32x1xf32> to vector<32x128xf32>
    %13 = arith.addf %9, %12 : vector<32x128xf32>
    %cst_8 = arith.constant 0.000000e+00 : f32
    %14 = vector.broadcast %cst_8 : f32 to vector<32x128xf32>
    %15 = arith.maximumf %13, %14 : vector<32x128xf32>
    %c0_9 = arith.constant 0 : index
    %c0_10 = arith.constant 0 : index
    %c0_11 = arith.constant 0 : index
    %16 = vector.load %arg4[%c0_9, %c0_10, %c0_11] : memref<3x32x32xbf16, #tpu.memory_space<vmem>>, vector<1x32x32xbf16>
    %17 = vector.shape_cast %16 : vector<1x32x32xbf16> to vector<32x32xbf16>
    %18 = arith.truncf %15 : vector<32x128xf32> to vector<32x128xbf16>
    %cst_12 = arith.constant dense<0.000000e+00> : vector<32x128xf32>
    %19 = tpu.matmul %17, %18, %cst_12 {dimension_numbers = #tpu.dot_dimension_numbers<[1], [0], [0], [1], [0, 0, 1, 1], [], []>} : vector<32x32xbf16>, vector<32x128xbf16>, vector<32x128xf32> -> vector<32x128xf32>
    %c0_13 = arith.constant 0 : index
    %c1 = arith.constant 1 : index
    %c0_14 = arith.constant 0 : index
    %c0_15 = arith.constant 0 : index
    %20 = vector.load %arg5[%c0_13, %c1, %c0_14, %c0_15] : memref<3x2x32x1xf32, #tpu.memory_space<vmem>>, vector<1x1x32x1xf32>
    %21 = vector.shape_cast %20 : vector<1x1x32x1xf32> to vector<32x1xf32>
    %22 = vector.broadcast %21 : vector<32x1xf32> to vector<32x128xf32>
    %23 = arith.addf %19, %22 : vector<32x128xf32>
    %24 = arith.addf %5, %23 : vector<32x128xf32>
    %c1_16 = arith.constant 1 : index
    %c0_17 = arith.constant 0 : index
    %c0_18 = arith.constant 0 : index
    %25 = vector.load %arg3[%c1_16, %c0_17, %c0_18] : memref<3x32x32xbf16, #tpu.memory_space<vmem>>, vector<1x32x32xbf16>
    %26 = vector.shape_cast %25 : vector<1x32x32xbf16> to vector<32x32xbf16>
    %27 = arith.truncf %24 : vector<32x128xf32> to vector<32x128xbf16>
    %cst_19 = arith.constant dense<0.000000e+00> : vector<32x128xf32>
    %28 = tpu.matmul %26, %27, %cst_19 {dimension_numbers = #tpu.dot_dimension_numbers<[1], [0], [0], [1], [0, 0, 1, 1], [], []>} : vector<32x32xbf16>, vector<32x128xbf16>, vector<32x128xf32> -> vector<32x128xf32>
    %c1_20 = arith.constant 1 : index
    %c0_21 = arith.constant 0 : index
    %c0_22 = arith.constant 0 : index
    %c0_23 = arith.constant 0 : index
    %29 = vector.load %arg5[%c1_20, %c0_21, %c0_22, %c0_23] : memref<3x2x32x1xf32, #tpu.memory_space<vmem>>, vector<1x1x32x1xf32>
    %30 = vector.shape_cast %29 : vector<1x1x32x1xf32> to vector<32x1xf32>
    %31 = vector.broadcast %30 : vector<32x1xf32> to vector<32x128xf32>
    %32 = arith.addf %28, %31 : vector<32x128xf32>
    %cst_24 = arith.constant 0.000000e+00 : f32
    %33 = vector.broadcast %cst_24 : f32 to vector<32x128xf32>
    %34 = arith.maximumf %32, %33 : vector<32x128xf32>
    %c1_25 = arith.constant 1 : index
    %c0_26 = arith.constant 0 : index
    %c0_27 = arith.constant 0 : index
    %35 = vector.load %arg4[%c1_25, %c0_26, %c0_27] : memref<3x32x32xbf16, #tpu.memory_space<vmem>>, vector<1x32x32xbf16>
    %36 = vector.shape_cast %35 : vector<1x32x32xbf16> to vector<32x32xbf16>
    %37 = arith.truncf %34 : vector<32x128xf32> to vector<32x128xbf16>
    %cst_28 = arith.constant dense<0.000000e+00> : vector<32x128xf32>
    %38 = tpu.matmul %36, %37, %cst_28 {dimension_numbers = #tpu.dot_dimension_numbers<[1], [0], [0], [1], [0, 0, 1, 1], [], []>} : vector<32x32xbf16>, vector<32x128xbf16>, vector<32x128xf32> -> vector<32x128xf32>
    %c1_29 = arith.constant 1 : index
    %c1_30 = arith.constant 1 : index
    %c0_31 = arith.constant 0 : index
    %c0_32 = arith.constant 0 : index
    %39 = vector.load %arg5[%c1_29, %c1_30, %c0_31, %c0_32] : memref<3x2x32x1xf32, #tpu.memory_space<vmem>>, vector<1x1x32x1xf32>
    %40 = vector.shape_cast %39 : vector<1x1x32x1xf32> to vector<32x1xf32>
    %41 = vector.broadcast %40 : vector<32x1xf32> to vector<32x128xf32>
    %42 = arith.addf %38, %41 : vector<32x128xf32>
    %43 = arith.addf %24, %42 : vector<32x128xf32>
    %c2 = arith.constant 2 : index
    %c0_33 = arith.constant 0 : index
    %c0_34 = arith.constant 0 : index
    %44 = vector.load %arg3[%c2, %c0_33, %c0_34] : memref<3x32x32xbf16, #tpu.memory_space<vmem>>, vector<1x32x32xbf16>
    %45 = vector.shape_cast %44 : vector<1x32x32xbf16> to vector<32x32xbf16>
    %46 = arith.truncf %43 : vector<32x128xf32> to vector<32x128xbf16>
    %cst_35 = arith.constant dense<0.000000e+00> : vector<32x128xf32>
    %47 = tpu.matmul %45, %46, %cst_35 {dimension_numbers = #tpu.dot_dimension_numbers<[1], [0], [0], [1], [0, 0, 1, 1], [], []>} : vector<32x32xbf16>, vector<32x128xbf16>, vector<32x128xf32> -> vector<32x128xf32>
    %c2_36 = arith.constant 2 : index
    %c0_37 = arith.constant 0 : index
    %c0_38 = arith.constant 0 : index
    %c0_39 = arith.constant 0 : index
    %48 = vector.load %arg5[%c2_36, %c0_37, %c0_38, %c0_39] : memref<3x2x32x1xf32, #tpu.memory_space<vmem>>, vector<1x1x32x1xf32>
    %49 = vector.shape_cast %48 : vector<1x1x32x1xf32> to vector<32x1xf32>
    %50 = vector.broadcast %49 : vector<32x1xf32> to vector<32x128xf32>
    %51 = arith.addf %47, %50 : vector<32x128xf32>
    %cst_40 = arith.constant 0.000000e+00 : f32
    %52 = vector.broadcast %cst_40 : f32 to vector<32x128xf32>
    %53 = arith.maximumf %51, %52 : vector<32x128xf32>
    %c2_41 = arith.constant 2 : index
    %c0_42 = arith.constant 0 : index
    %c0_43 = arith.constant 0 : index
    %54 = vector.load %arg4[%c2_41, %c0_42, %c0_43] : memref<3x32x32xbf16, #tpu.memory_space<vmem>>, vector<1x32x32xbf16>
    %55 = vector.shape_cast %54 : vector<1x32x32xbf16> to vector<32x32xbf16>
    %56 = arith.truncf %53 : vector<32x128xf32> to vector<32x128xbf16>
    %cst_44 = arith.constant dense<0.000000e+00> : vector<32x128xf32>
    %57 = tpu.matmul %55, %56, %cst_44 {dimension_numbers = #tpu.dot_dimension_numbers<[1], [0], [0], [1], [0, 0, 1, 1], [], []>} : vector<32x32xbf16>, vector<32x128xbf16>, vector<32x128xf32> -> vector<32x128xf32>
    %c2_45 = arith.constant 2 : index
    %c1_46 = arith.constant 1 : index
    %c0_47 = arith.constant 0 : index
    %c0_48 = arith.constant 0 : index
    %58 = vector.load %arg5[%c2_45, %c1_46, %c0_47, %c0_48] : memref<3x2x32x1xf32, #tpu.memory_space<vmem>>, vector<1x1x32x1xf32>
    %59 = vector.shape_cast %58 : vector<1x1x32x1xf32> to vector<32x1xf32>
    %60 = vector.broadcast %59 : vector<32x1xf32> to vector<32x128xf32>
    %61 = arith.addf %57, %60 : vector<32x128xf32>
    %62 = arith.addf %43, %61 : vector<32x128xf32>
    %63 = arith.truncf %62 : vector<32x128xf32> to vector<32x128xbf16>
    %c0_49 = arith.constant 0 : index
    %c0_50 = arith.constant 0 : index
    %64 = arith.index_cast %1 : i32 to index
    %65 = vector.load %arg6[%c0_49, %c0_50, %64] : memref<1x32x128xbf16, #tpu.memory_space<vmem>>, vector<1x32x128xbf16>
    %66 = vector.shape_cast %65 : vector<1x32x128xbf16> to vector<32x128xbf16>
    %67 = vector.shape_cast %63 : vector<32x128xbf16> to vector<1x32x128xbf16>
    tpu.vector_store %arg6[%c0_49, %c0_50, %64], %67 {strides = array<i32>} : memref<1x32x128xbf16, #tpu.memory_space<vmem>>, vector<1x32x128xbf16>,
    %c1_i32 = arith.constant 1 : i32
    return
  }
  func.func @transform_0(%arg0: i32, %arg1: i32) -> (i32, i32, i32) {
    %c0_i32 = arith.constant 0 : i32
    %c0_i32_0 = arith.constant 0 : i32
    return %arg0, %c0_i32, %arg1 : i32, i32, i32
  }
  func.func @transform_1(%arg0: i32, %arg1: i32) -> (i32, i32, i32) {
    %c0_i32 = arith.constant 0 : i32
    %c0_i32_0 = arith.constant 0 : i32
    %c0_i32_1 = arith.constant 0 : i32
    %c0_i32_2 = arith.constant 0 : i32
    return %c0_i32, %c0_i32_0, %c0_i32_1 : i32, i32, i32
  }
  func.func @transform_2(%arg0: i32, %arg1: i32) -> (i32, i32, i32) {
    %c0_i32 = arith.constant 0 : i32
    %c0_i32_0 = arith.constant 0 : i32
    %c0_i32_1 = arith.constant 0 : i32
    %c0_i32_2 = arith.constant 0 : i32
    return %c0_i32, %c0_i32_0, %c0_i32_1 : i32, i32, i32
  }
  func.func @transform_3(%arg0: i32, %arg1: i32) -> (i32, i32, i32, i32) {
    %c0_i32 = arith.constant 0 : i32
    %c0_i32_0 = arith.constant 0 : i32
    %c0_i32_1 = arith.constant 0 : i32
    %c0_i32_2 = arith.constant 0 : i32
    %c0_i32_3 = arith.constant 0 : i32
    return %c0_i32, %c0_i32_0, %c0_i32_1, %c0_i32_2 : i32, i32, i32, i32
  }
  func.func @transform_4(%arg0: i32, %arg1: i32) -> (i32, i32, i32) {
    %c0_i32 = arith.constant 0 : i32
    %c0_i32_0 = arith.constant 0 : i32
    return %arg0, %c0_i32, %arg1 : i32, i32, i32
  }
}

module attributes {stable_mosaic.version = 11 : i64} {
  func.func @_resblock_stack_kernel(%arg0: i32, %arg1: i32, %arg2: memref<1x32x128xbf16, #tpu.memory_space<vmem>>, %arg3: memref<3x32x32xbf16, #tpu.memory_space<vmem>>, %arg4: memref<3x32x32xbf16, #tpu.memory_space<vmem>>, %arg5: memref<3x2x32x1xf32, #tpu.memory_space<vmem>>, %arg6: memref<1x32x128xbf16, #tpu.memory_space<vmem>>) attributes {dimension_semantics = [#tpu.dimension_semantics<parallel>, #tpu.dimension_semantics<parallel>], iteration_bounds = array<i64: 2, 2>, scalar_prefetch = 0 : i64, scratch_operands = 0 : i64, tpu.core_type = #tpu.core_type<tc>, window_params = [{transform_indices = @transform_0, window_bounds = array<i64: 1, 32, 128>}, {pipeline_mode = #tpu.pipeline_mode<synchronous>, transform_indices = @transform_1, window_bounds = array<i64: 3, 32, 32>}, {pipeline_mode = #tpu.pipeline_mode<synchronous>, transform_indices = @transform_2, window_bounds = array<i64: 3, 32, 32>}, {pipeline_mode = #tpu.pipeline_mode<synchronous>, transform_indices = @transform_3, window_bounds = array<i64: 3, 2, 32, 1>}, {transform_indices = @transform_4, window_bounds = array<i64: 1, 32, 128>}]} {
    %c0_i32 = arith.constant 0 : i32
    %c128_i32 = arith.constant 128 : i32
    %0 = arith.muli %c0_i32, %c128_i32 : i32
    %1 = tpu.assume_multiple %0, 128 : i32
    %c0 = arith.constant 0 : index
    %c0_0 = arith.constant 0 : index
    %2 = arith.index_cast %1 : i32 to index
    %3 = vector.load %arg2[%c0, %c0_0, %2] : memref<1x32x128xbf16, #tpu.memory_space<vmem>>, vector<1x32x128xbf16>
    %4 = vector.shape_cast %3 : vector<1x32x128xbf16> to vector<32x128xbf16>
    %5 = arith.extf %4 : vector<32x128xbf16> to vector<32x128xf32>
    %c0_1 = arith.constant 0 : index
    %c0_2 = arith.constant 0 : index
    %c0_3 = arith.constant 0 : index
    %6 = vector.load %arg3[%c0_1, %c0_2, %c0_3] : memref<3x32x32xbf16, #tpu.memory_space<vmem>>, vector<1x32x32xbf16>
    %7 = vector.shape_cast %6 : vector<1x32x32xbf16> to vector<32x32xbf16>
    %8 = arith.truncf %5 : vector<32x128xf32> to vector<32x128xbf16>
    %cst = arith.constant dense<0.000000e+00> : vector<32x128xf32>
    %9 = tpu.matmul %7, %8, %cst {dimension_numbers = #tpu.dot_dimension_numbers<[1], [0], [0], [1], [0, 0, 1, 1], [], []>} : vector<32x32xbf16>, vector<32x128xbf16>, vector<32x128xf32> -> vector<32x128xf32>
    %c0_4 = arith.constant 0 : index
    %c0_5 = arith.constant 0 : index
    %c0_6 = arith.constant 0 : index
    %c0_7 = arith.constant 0 : index
    %10 = vector.load %arg5[%c0_4, %c0_5, %c0_6, %c0_7] : memref<3x2x32x1xf32, #tpu.memory_space<vmem>>, vector<1x1x32x1xf32>
    %11 = vector.shape_cast %10 : vector<1x1x32x1xf32> to vector<32x1xf32>
    %12 = vector.broadcast %11 : vector<32x1xf32> to vector<32x128xf32>
    %13 = arith.addf %9, %12 : vector<32x128xf32>
    %cst_8 = arith.constant 0.000000e+00 : f32
    %14 = vector.broadcast %cst_8 : f32 to vector<32x128xf32>
    %15 = arith.maximumf %13, %14 : vector<32x128xf32>
    %c0_9 = arith.constant 0 : index
    %c0_10 = arith.constant 0 : index
    %c0_11 = arith.constant 0 : index
    %16 = vector.load %arg4[%c0_9, %c0_10, %c0_11] : memref<3x32x32xbf16, #tpu.memory_space<vmem>>, vector<1x32x32xbf16>
    %17 = vector.shape_cast %16 : vector<1x32x32xbf16> to vector<32x32xbf16>
    %18 = arith.truncf %15 : vector<32x128xf32> to vector<32x128xbf16>
    %cst_12 = arith.constant dense<0.000000e+00> : vector<32x128xf32>
    %19 = tpu.matmul %17, %18, %cst_12 {dimension_numbers = #tpu.dot_dimension_numbers<[1], [0], [0], [1], [0, 0, 1, 1], [], []>} : vector<32x32xbf16>, vector<32x128xbf16>, vector<32x128xf32> -> vector<32x128xf32>
    %c0_13 = arith.constant 0 : index
    %c1 = arith.constant 1 : index
    %c0_14 = arith.constant 0 : index
    %c0_15 = arith.constant 0 : index
    %20 = vector.load %arg5[%c0_13, %c1, %c0_14, %c0_15] : memref<3x2x32x1xf32, #tpu.memory_space<vmem>>, vector<1x1x32x1xf32>
    %21 = vector.shape_cast %20 : vector<1x1x32x1xf32> to vector<32x1xf32>
    %22 = vector.broadcast %21 : vector<32x1xf32> to vector<32x128xf32>
    %23 = arith.addf %19, %22 : vector<32x128xf32>
    %24 = arith.addf %5, %23 : vector<32x128xf32>
    %c1_16 = arith.constant 1 : index
    %c0_17 = arith.constant 0 : index
    %c0_18 = arith.constant 0 : index
    %25 = vector.load %arg3[%c1_16, %c0_17, %c0_18] : memref<3x32x32xbf16, #tpu.memory_space<vmem>>, vector<1x32x32xbf16>
    %26 = vector.shape_cast %25 : vector<1x32x32xbf16> to vector<32x32xbf16>
    %27 = arith.truncf %24 : vector<32x128xf32> to vector<32x128xbf16>
    %cst_19 = arith.constant dense<0.000000e+00> : vector<32x128xf32>
    %28 = tpu.matmul %26, %27, %cst_19 {dimension_numbers = #tpu.dot_dimension_numbers<[1], [0], [0], [1], [0, 0, 1, 1], [], []>} : vector<32x32xbf16>, vector<32x128xbf16>, vector<32x128xf32> -> vector<32x128xf32>
    %c1_20 = arith.constant 1 : index
    %c0_21 = arith.constant 0 : index
    %c0_22 = arith.constant 0 : index
    %c0_23 = arith.constant 0 : index
    %29 = vector.load %arg5[%c1_20, %c0_21, %c0_22, %c0_23] : memref<3x2x32x1xf32, #tpu.memory_space<vmem>>, vector<1x1x32x1xf32>
    %30 = vector.shape_cast %29 : vector<1x1x32x1xf32> to vector<32x1xf32>
    %31 = vector.broadcast %30 : vector<32x1xf32> to vector<32x128xf32>
    %32 = arith.addf %28, %31 : vector<32x128xf32>
    %cst_24 = arith.constant 0.000000e+00 : f32
    %33 = vector.broadcast %cst_24 : f32 to vector<32x128xf32>
    %34 = arith.maximumf %32, %33 : vector<32x128xf32>
    %c1_25 = arith.constant 1 : index
    %c0_26 = arith.constant 0 : index
    %c0_27 = arith.constant 0 : index
    %35 = vector.load %arg4[%c1_25, %c0_26, %c0_27] : memref<3x32x32xbf16, #tpu.memory_space<vmem>>, vector<1x32x32xbf16>
    %36 = vector.shape_cast %35 : vector<1x32x32xbf16> to vector<32x32xbf16>
    %37 = arith.truncf %34 : vector<32x128xf32> to vector<32x128xbf16>
    %cst_28 = arith.constant dense<0.000000e+00> : vector<32x128xf32>
    %38 = tpu.matmul %36, %37, %cst_28 {dimension_numbers = #tpu.dot_dimension_numbers<[1], [0], [0], [1], [0, 0, 1, 1], [], []>} : vector<32x32xbf16>, vector<32x128xbf16>, vector<32x128xf32> -> vector<32x128xf32>
    %c1_29 = arith.constant 1 : index
    %c1_30 = arith.constant 1 : index
    %c0_31 = arith.constant 0 : index
    %c0_32 = arith.constant 0 : index
    %39 = vector.load %arg5[%c1_29, %c1_30, %c0_31, %c0_32] : memref<3x2x32x1xf32, #tpu.memory_space<vmem>>, vector<1x1x32x1xf32>
    %40 = vector.shape_cast %39 : vector<1x1x32x1xf32> to vector<32x1xf32>
    %41 = vector.broadcast %40 : vector<32x1xf32> to vector<32x128xf32>
    %42 = arith.addf %38, %41 : vector<32x128xf32>
    %43 = arith.addf %24, %42 : vector<32x128xf32>
    %c2 = arith.constant 2 : index
    %c0_33 = arith.constant 0 : index
    %c0_34 = arith.constant 0 : index
    %44 = vector.load %arg3[%c2, %c0_33, %c0_34] : memref<3x32x32xbf16, #tpu.memory_space<vmem>>, vector<1x32x32xbf16>
    %45 = vector.shape_cast %44 : vector<1x32x32xbf16> to vector<32x32xbf16>
    %46 = arith.truncf %43 : vector<32x128xf32> to vector<32x128xbf16>
    %cst_35 = arith.constant dense<0.000000e+00> : vector<32x128xf32>
    %47 = tpu.matmul %45, %46, %cst_35 {dimension_numbers = #tpu.dot_dimension_numbers<[1], [0], [0], [1], [0, 0, 1, 1], [], []>} : vector<32x32xbf16>, vector<32x128xbf16>, vector<32x128xf32> -> vector<32x128xf32>
    %c2_36 = arith.constant 2 : index
    %c0_37 = arith.constant 0 : index
    %c0_38 = arith.constant 0 : index
    %c0_39 = arith.constant 0 : index
    %48 = vector.load %arg5[%c2_36, %c0_37, %c0_38, %c0_39] : memref<3x2x32x1xf32, #tpu.memory_space<vmem>>, vector<1x1x32x1xf32>
    %49 = vector.shape_cast %48 : vector<1x1x32x1xf32> to vector<32x1xf32>
    %50 = vector.broadcast %49 : vector<32x1xf32> to vector<32x128xf32>
    %51 = arith.addf %47, %50 : vector<32x128xf32>
    %cst_40 = arith.constant 0.000000e+00 : f32
    %52 = vector.broadcast %cst_40 : f32 to vector<32x128xf32>
    %53 = arith.maximumf %51, %52 : vector<32x128xf32>
    %c2_41 = arith.constant 2 : index
    %c0_42 = arith.constant 0 : index
    %c0_43 = arith.constant 0 : index
    %54 = vector.load %arg4[%c2_41, %c0_42, %c0_43] : memref<3x32x32xbf16, #tpu.memory_space<vmem>>, vector<1x32x32xbf16>
    %55 = vector.shape_cast %54 : vector<1x32x32xbf16> to vector<32x32xbf16>
    %56 = arith.truncf %53 : vector<32x128xf32> to vector<32x128xbf16>
    %cst_44 = arith.constant dense<0.000000e+00> : vector<32x128xf32>
    %57 = tpu.matmul %55, %56, %cst_44 {dimension_numbers = #tpu.dot_dimension_numbers<[1], [0], [0], [1], [0, 0, 1, 1], [], []>} : vector<32x32xbf16>, vector<32x128xbf16>, vector<32x128xf32> -> vector<32x128xf32>
    %c2_45 = arith.constant 2 : index
    %c1_46 = arith.constant 1 : index
    %c0_47 = arith.constant 0 : index
    %c0_48 = arith.constant 0 : index
    %58 = vector.load %arg5[%c2_45, %c1_46, %c0_47, %c0_48] : memref<3x2x32x1xf32, #tpu.memory_space<vmem>>, vector<1x1x32x1xf32>
    %59 = vector.shape_cast %58 : vector<1x1x32x1xf32> to vector<32x1xf32>
    %60 = vector.broadcast %59 : vector<32x1xf32> to vector<32x128xf32>
    %61 = arith.addf %57, %60 : vector<32x128xf32>
    %62 = arith.addf %43, %61 : vector<32x128xf32>
    %63 = arith.truncf %62 : vector<32x128xf32> to vector<32x128xbf16>
    %c0_49 = arith.constant 0 : index
    %c0_50 = arith.constant 0 : index
    %64 = arith.index_cast %1 : i32 to index
    %65 = vector.load %arg6[%c0_49, %c0_50, %64] : memref<1x32x128xbf16, #tpu.memory_space<vmem>>, vector<1x32x128xbf16>
    %66 = vector.shape_cast %65 : vector<1x32x128xbf16> to vector<32x128xbf16>
    %67 = vector.shape_cast %63 : vector<32x128xbf16> to vector<1x32x128xbf16>
    tpu.vector_store %arg6[%c0_49, %c0_50, %64], %67 {strides = array<i32>} : memref<1x32x128xbf16, #tpu.memory_space<vmem>>, vector<1x32x128xbf16>,
    %c1_i32 = arith.constant 1 : i32
    return
  }
  func.func @transform_0(%arg0: i32, %arg1: i32) -> (i32, i32, i32) {
    %c0_i32 = arith.constant 0 : i32
    %c0_i32_0 = arith.constant 0 : i32
    return %arg0, %c0_i32, %arg1 : i32, i32, i32
  }
  func.func @transform_1(%arg0: i32, %arg1: i32) -> (i32, i32, i32) {
    %c0_i32 = arith.constant 0 : i32
    %c0_i32_0 = arith.constant 0 : i32
    %c0_i32_1 = arith.constant 0 : i32
    %c0_i32_2 = arith.constant 0 : i32
    return %c0_i32, %c0_i32_0, %c0_i32_1 : i32, i32, i32
  }
  func.func @transform_2(%arg0: i32, %arg1: i32) -> (i32, i32, i32) {
    %c0_i32 = arith.constant 0 : i32
    %c0_i32_0 = arith.constant 0 : i32
    %c0_i32_1 = arith.constant 0 : i32
    %c0_i32_2 = arith.constant 0 : i32
    return %c0_i32, %c0_i32_0, %c0_i32_1 : i32, i32, i32
  }
  func.func @transform_3(%arg0: i32, %arg1: i32) -> (i32, i32, i32, i32) {
    %c0_i32 = arith.constant 0 : i32
    %c0_i32_0 = arith.constant 0 : i32
    %c0_i32_1 = arith.constant 0 : i32
    %c0_i32_2 = arith.constant 0 : i32
    %c0_i32_3 = arith.constant 0 : i32
    return %c0_i32, %c0_i32_0, %c0_i32_1, %c0_i32_2 : i32, i32, i32, i32
  }
  func.func @transform_4(%arg0: i32, %arg1: i32) -> (i32, i32, i32) {
    %c0_i32 = arith.constant 0 : i32
    %c0_i32_0 = arith.constant 0 : i32
    return %arg0, %c0_i32, %arg1 : i32, i32, i32
  }
}

</mosaic_0001>

<llo_original>
// kernel: tpu_custom_call.1
$region0: #{tpu_custom_call.1}
  #allocation0 [shape = 'u32[]', space=smem, size = 0x4, offset = 0x4, fixed_abs, tag = 'smem constant byte address 0x4 - core index']
  #allocation1 [shape = 'u32[144,128]{1,0:T(1,128)}', space=vmem, size = 0x12000, scoped, tag = 'internal scratch']
  %s0 = inlined_call_operand.vmem [shape: bf16[2,32,160], index: 0, kind: input, shape index: {}]
  %s1 = inlined_call_operand.vmem [shape: bf16[3,32,32], index: 1, kind: input, shape index: {}]
  %s2 = inlined_call_operand.vmem [shape: bf16[3,32,32], index: 2, kind: input, shape index: {}]
  %s3 = inlined_call_operand.vmem [shape: f32[3,2,32,1], index: 3, kind: input, shape index: {}]
  %s4 = inlined_call_operand.hbm [shape: bf16[2,32,160], index: 4, kind: output, shape index: {}]
  %s5 = sld [smem:[#allocation0]]
  $region90: #{tpu_custom_call.1} parent=0
    _
  %s7 = ssub.s32 1, %s5
  %s8 = scalar_select 0, %s7, %s5
  $region1: #{tpu_custom_call.1} parent=0
    #allocation2 [shape = 'u8[16384]{0}', space=vmem, size = 0x4000, scoped, tag = 'input window, operand 0']
    #allocation3 [shape = 'u8[16384]{0}', space=vmem, size = 0x4000, scoped, tag = 'output window, operand 0']
    #allocation4 [shape = 's32[2]{0}', space=sflag, size = 0x8, scoped, tag = 'scoped memory for tpu_custom_call.1']
    %9 = vsyncpa [#allocation4], 0
    %s10 = scalar_lea.sflag [#allocation4], 1
    %11 = vsyncpa %s10, 0
    loop: start=0, step=1, limit=6
    $region2: #{tpu_custom_call.1} parent=1 // loop_pre_header
      _
    $region3: #{tpu_custom_call.1} parent=1 // loop_header
      %s13 = sphi 0, %s17
      %p14 = scmp.ge.s32.totalorder %s13, 6
      %s20 = sphi 0, %s32
      %s21 = sphi 0, %s28
      %s22 = sphi 0, %s20
      %s23 = sphi 0, %s21
      %s24 = sphi 0, %s22
      %s25 = sphi 0, %s23
      %s37 = sphi 0, %s39
      %s40 = sphi 0, %s37
      %s41 = sphi 0, %s40
      %s57 = sphi 0, %s41
      %s61 = sphi 0, %s61
      %s63 = sphi 0, %s61
      %s64 = sphi 0, %s63
      %s78 = sphi 0, %s64
      %s82 = sphi 0, %s82
      %s84 = sphi 0, %s82
      %s85 = sphi 0, %s84
      %s99 = sphi 0, %s85
      %s103 = sphi 0, %s103
      %s105 = sphi 0, %s103
      %s106 = sphi 0, %s105
      %s120 = sphi 0, %s106
      %s128 = sphi 0, %s130
      %s131 = sphi 0, %s128
      %s132 = sphi 0, %s131
      %s148 = sphi 0, %s132
    $region4: #{tpu_custom_call.1} parent=1 // loop_header_branch
      %16 = sbr.rel (%p14) target = $region8
    $region5: #{tpu_custom_call.1} parent=1 // loop_body
      %s18 = ssub.s32 %s13, 1
      %s19 = ssub.s32 %s13, 2
      %s26 = sadd.s32 1, %s21
      %p27 = scmp.ge.s32.totalorder %s26, 2
      %s28 = scalar_select %p27, 0, %s26
      %s29 = sadd.s32 1, %s20
      %s30 = scalar_select %p27, %s29, %s20
      %p31 = scmp.ge.s32.totalorder %s30, 2
      %s32 = scalar_select %p31, 0, %s30
      %s33 = ssub.s32 %s20, %s32
      %s34 = ssub.s32 %s21, %s28
      %s35 = sor.u32 %s33, %s34
      %p36 = scmp.eq.s32.totalorder %s35, 0
      %s38 = sadd.s32 %s37, 1
      %s39 = scalar_select %p36, %s37, %s38
      %p42 = pneg %p36
      %p43 = scmp.eq.s32.totalorder %s13, 3
      %p44 = por %p42, %p43
      %p45 = scmp.ne.s32.totalorder %s37, %s40
      %p46 = scmp.eq.s32.totalorder %s13, 0
      %p47 = por %p45, %p46
      %p48 = scmp.ne.s32.totalorder %s37, %s40
      %p49 = scmp.eq.s32.totalorder %s18, 3
      %p50 = por %p48, %p49
      %p51 = scmp.ne.s32.totalorder %s40, %s41
      %p52 = scmp.eq.s32.totalorder %s18, 0
      %p53 = por %p51, %p52
      %p54 = scmp.ne.s32.totalorder %s40, %s41
      %p55 = scmp.eq.s32.totalorder %s19, 3
      %p56 = por %p54, %p55
      %p58 = scmp.ne.s32.totalorder %s41, %s57
      %p59 = scmp.eq.s32.totalorder %s19, 0
      %p60 = por %p58, %p59
      %s62 = sadd.s32 %s61, 1
      %p65 = scmp.eq.s32.totalorder %s13, 3
      %p66 = scmp.ne.s32.totalorder %s61, %s63
      %p67 = scmp.eq.s32.totalorder %s13, 0
      %p68 = por %p66, %p67
      %p69 = scmp.ne.s32.totalorder %s61, %s63
      %p70 = scmp.eq.s32.totalorder %s18, 3
      %p71 = por %p69, %p70
      %p72 = scmp.ne.s32.totalorder %s63, %s64
      %p73 = scmp.eq.s32.totalorder %s18, 0
      %p74 = por %p72, %p73
      %p75 = scmp.ne.s32.totalorder %s63, %s64
      %p76 = scmp.eq.s32.totalorder %s19, 3
      %p77 = por %p75, %p76
      %p79 = scmp.ne.s32.totalorder %s64, %s78
      %p80 = scmp.eq.s32.totalorder %s19, 0
      %p81 = por %p79, %p80
      %s83 = sadd.s32 %s82, 1
      %p86 = scmp.eq.s32.totalorder %s13, 3
      %p87 = scmp.ne.s32.totalorder %s82, %s84
      %p88 = scmp.eq.s32.totalorder %s13, 0
      %p89 = por %p87, %p88
      %p90 = scmp.ne.s32.totalorder %s82, %s84
      %p91 = scmp.eq.s32.totalorder %s18, 3
      %p92 = por %p90, %p91
      %p93 = scmp.ne.s32.totalorder %s84, %s85
      %p94 = scmp.eq.s32.totalorder %s18, 0
      %p95 = por %p93, %p94
      %p96 = scmp.ne.s32.totalorder %s84, %s85
      %p97 = scmp.eq.s32.totalorder %s19, 3
      %p98 = por %p96, %p97
      %p100 = scmp.ne.s32.totalorder %s85, %s99
      %p101 = scmp.eq.s32.totalorder %s19, 0
      %p102 = por %p100, %p101
      %s104 = sadd.s32 %s103, 1
      %p107 = scmp.eq.s32.totalorder %s13, 3
      %p108 = scmp.ne.s32.totalorder %s103, %s105
      %p109 = scmp.eq.s32.totalorder %s13, 0
      %p110 = por %p108, %p109
      %p111 = scmp.ne.s32.totalorder %s103, %s105
      %p112 = scmp.eq.s32.totalorder %s18, 3
      %p113 = por %p111, %p112
      %p114 = scmp.ne.s32.totalorder %s105, %s106
      %p115 = scmp.eq.s32.totalorder %s18, 0
      %p116 = por %p114, %p115
      %p117 = scmp.ne.s32.totalorder %s105, %s106
      %p118 = scmp.eq.s32.totalorder %s19, 3
      %p119 = por %p117, %p118
      %p121 = scmp.ne.s32.totalorder %s106, %s120
      %p122 = scmp.eq.s32.totalorder %s19, 0
      %p123 = por %p121, %p122
      %s124 = ssub.s32 %s20, %s32
      %s125 = ssub.s32 %s21, %s28
      %s126 = sor.u32 %s124, %s125
      %p127 = scmp.eq.s32.totalorder %s126, 0
      %s129 = sadd.s32 %s128, 1
      %s130 = scalar_select %p127, %s128, %s129
      %p133 = pneg %p127
      %p134 = scmp.eq.s32.totalorder %s13, 3
      %p135 = por %p133, %p134
      %p136 = scmp.ne.s32.totalorder %s128, %s131
      %p137 = scmp.eq.s32.totalorder %s13, 0
      %p138 = por %p136, %p137
      %p139 = scmp.ne.s32.totalorder %s128, %s131
      %p140 = scmp.eq.s32.totalorder %s18, 3
      %p141 = por %p139, %p140
      %p142 = scmp.ne.s32.totalorder %s131, %s132
      %p143 = scmp.eq.s32.totalorder %s18, 0
      %p144 = por %p142, %p143
      %p145 = scmp.ne.s32.totalorder %s131, %s132
      %p146 = scmp.eq.s32.totalorder %s19, 3
      %p147 = por %p145, %p146
      %p149 = scmp.ne.s32.totalorder %s132, %s148
      %p150 = scmp.eq.s32.totalorder %s19, 0
      %p151 = por %p149, %p150
      %p152 = scmp.le.s32.totalorder 1, %s13
      %p153 = scmp.lt.s32.totalorder %s13, 5
      %p154 = pnand %p152, %p153
      %p155 = pneg %p154
      // Predicated region
      $region9: #{tpu_custom_call.1} parent=5 // pred_check
        _
      $region10: #{tpu_custom_call.1} parent=5 // pred_check_branch
        %157 = sbr.rel (%p154) target = $region12
      $region11: #{tpu_custom_call.1} parent=5 // pred_region
        %s158 = ssub.s32 %s13, 1
        // Predicated region
        $region13: #{tpu_custom_call.1} parent=11 // pred_check
          %p159 = pneg %p74
        $region14: #{tpu_custom_call.1} parent=11 // pred_check_branch
          %161 = sbr.rel (%p159) target = $region16
        $region15: #{tpu_custom_call.1} parent=11 // pred_region
          _
        $region16: #{tpu_custom_call.1} parent=11 // pred_fallthru
          _
        // Predicated region
        $region17: #{tpu_custom_call.1} parent=11 // pred_check
          %p162 = pneg %p95
        $region18: #{tpu_custom_call.1} parent=11 // pred_check_branch
          %164 = sbr.rel (%p162) target = $region20
        $region19: #{tpu_custom_call.1} parent=11 // pred_region
          _
        $region20: #{tpu_custom_call.1} parent=11 // pred_fallthru
          _
        // Predicated region
        $region21: #{tpu_custom_call.1} parent=11 // pred_check
          %p165 = pneg %p116
        $region22: #{tpu_custom_call.1} parent=11 // pred_check_branch
          %167 = sbr.rel (%p165) target = $region24
        $region23: #{tpu_custom_call.1} parent=11 // pred_region
          _
        $region24: #{tpu_custom_call.1} parent=11 // pred_fallthru
          _
      $region12: #{tpu_custom_call.1} parent=5 // pred_fallthru
        _
      %p168 = scmp.lt.s32.totalorder %s13, 4
      // Predicated region
      $region25: #{tpu_custom_call.1} parent=5 // pred_check
        %p169 = pneg %p168
      $region26: #{tpu_custom_call.1} parent=5 // pred_check_branch
        %171 = sbr.rel (%p169) target = $region28
      $region27: #{tpu_custom_call.1} parent=5 // pred_region
        // Predicated region
        $region29: #{tpu_custom_call.1} parent=27 // pred_check
          %p172 = pneg %p47
        $region30: #{tpu_custom_call.1} parent=27 // pred_check_branch
          %174 = sbr.rel (%p172) target = $region32
        $region31: #{tpu_custom_call.1} parent=27 // pred_region
          %s175 = sand.u32 %s37, 1
          %s176 = sand.u32 %s37, 1
          %s177 = smul.addr %s176, 16
          %s178 = scalar_lea.vmem [#allocation2], %s177
          %s179 = smul.addr %s20, 8
          %s180 = sadd.s32 %s21, %s179
          %s181 = smul.addr %s180, 4
          %s182 = scalar_lea.vmem %s0, %s181
          // Predicated region
          $region33: #{tpu_custom_call.1} parent=31 // pred_check
            _
          $region34: #{tpu_custom_call.1} parent=31 // pred_check_branch
            %184 = sbr.rel (0) target = $region36
          $region35: #{tpu_custom_call.1} parent=31 // pred_region
            // Predicated region
            $region37: #{tpu_custom_call.1} parent=35 // pred_check
              _
            $region38: #{tpu_custom_call.1} parent=35 // pred_check_branch
              %186 = sbr.rel target = $region40
            $region39: #{tpu_custom_call.1} parent=35 // pred_region
              // Predicated region
              $region52: #{tpu_custom_call.1} parent=39 // pred_check
                _
              $region53: #{tpu_custom_call.1} parent=39 // pred_check_branch
                %208 = sbr.rel (0) target = $region55
              $region54: #{tpu_custom_call.1} parent=39 // pred_region
                loop: start=0, step=1, limit=1
                $region56: #{tpu_custom_call.1} parent=54 // loop_pre_header
                  _
                $region57: #{tpu_custom_call.1} parent=54 // loop_header
                  %s210 = sphi 0, %s214
                  %p211 = scmp.ge.s32.totalorder %s210, 1
                  %s215 = sphi %s182, %s182
                  %s216 = sphi %s178, %s178
                $region58: #{tpu_custom_call.1} parent=54 // loop_header_branch
                  %213 = sbr.rel (%p211) target = $region62
                $region59: #{tpu_custom_call.1} parent=54 // loop_body
                  _
                $region60: #{tpu_custom_call.1} parent=54 // loop_footer
                  %s214 = sadd.s32 1, %s210
                $region61: #{tpu_custom_call.1} parent=54 // loop_footer_branch
                  %209 = sbr.rel target = $region57
                $region62: #{tpu_custom_call.1} parent=54 // loop_exit
                  _
                %s218 = ssub.s32 16, 1
                loop: start=0, step=1, limit=1
                $region63: #{tpu_custom_call.1} parent=54 // loop_pre_header
                  _
                $region64: #{tpu_custom_call.1} parent=54 // loop_header
                  %s220 = sphi 0, %s224
                  %p221 = scmp.ge.s32.totalorder %s220, 1
                  %s225 = sphi %s182, %s182
                  %s226 = sphi %s178, %s178
                $region65: #{tpu_custom_call.1} parent=54 // loop_header_branch
                  %223 = sbr.rel (%p221) target = $region69
                $region66: #{tpu_custom_call.1} parent=54 // loop_body
                  %v227 = vld [vmem:[%s225] sm:%s218]
                  %228 = vst [vmem:[%s226] sm:%s218] %v227
                  %v229 = vld [vmem:[%s225 + $0x8] sm:%s218]
                  %230 = vst [vmem:[%s226 + $0x4] sm:%s218] %v229
                  %v231 = vld [vmem:[%s225 + $0x10] sm:%s218]
                  %232 = vst [vmem:[%s226 + $0x8] sm:%s218] %v231
                  %v233 = vld [vmem:[%s225 + $0x18] sm:%s218]
                  %234 = vst [vmem:[%s226 + $0xc] sm:%s218] %v233
                $region67: #{tpu_custom_call.1} parent=54 // loop_footer
                  %s224 = sadd.s32 1, %s220
                $region68: #{tpu_custom_call.1} parent=54 // loop_footer_branch
                  %219 = sbr.rel target = $region64
                $region69: #{tpu_custom_call.1} parent=54 // loop_exit
                  _
              $region55: #{tpu_custom_call.1} parent=39 // pred_fallthru
                _
            $region40: #{tpu_custom_call.1} parent=35 // pred_fallthru
              _
            // Predicated region
            $region41: #{tpu_custom_call.1} parent=35 // pred_check
              _
            $region42: #{tpu_custom_call.1} parent=35 // pred_check_branch
              %188 = sbr.rel (0) target = $region44
            $region43: #{tpu_custom_call.1} parent=35 // pred_region
              %s190 = ssub.s32 16, 1
              loop: start=0, step=1, limit=1
              $region45: #{tpu_custom_call.1} parent=43 // loop_pre_header
                _
              $region46: #{tpu_custom_call.1} parent=43 // loop_header
                %s192 = sphi 0, %s196
                %p193 = scmp.ge.s32.totalorder %s192, 1
                %s197 = sphi %s182, %s182
                %s198 = sphi %s178, %s178
              $region47: #{tpu_custom_call.1} parent=43 // loop_header_branch
                %195 = sbr.rel (%p193) target = $region51
              $region48: #{tpu_custom_call.1} parent=43 // loop_body
                %v199 = vld [vmem:[%s197] sm:%s190]
                %200 = vst [vmem:[%s198] sm:%s190] %v199
                %v201 = vld [vmem:[%s197 + $0x8] sm:%s190]
                %202 = vst [vmem:[%s198 + $0x4] sm:%s190] %v201
                %v203 = vld [vmem:[%s197 + $0x10] sm:%s190]
                %204 = vst [vmem:[%s198 + $0x8] sm:%s190] %v203
                %v205 = vld [vmem:[%s197 + $0x18] sm:%s190]
                %206 = vst [vmem:[%s198 + $0xc] sm:%s190] %v205
              $region49: #{tpu_custom_call.1} parent=43 // loop_footer
                %s196 = sadd.s32 1, %s192
              $region50: #{tpu_custom_call.1} parent=43 // loop_footer_branch
                %191 = sbr.rel target = $region46
              $region51: #{tpu_custom_call.1} parent=43 // loop_exit
                _
            $region44: #{tpu_custom_call.1} parent=35 // pred_fallthru
              _
          $region36: #{tpu_custom_call.1} parent=31 // pred_fallthru
            _
          %235 = vnop
        $region32: #{tpu_custom_call.1} parent=27 // pred_fallthru
          _
      $region28: #{tpu_custom_call.1} parent=5 // pred_fallthru
        _
      %p236 = scmp.le.s32.totalorder 1, %s13
      %p237 = scmp.lt.s32.totalorder %s13, 5
      %p238 = pnand %p236, %p237
      %p239 = pneg %p238
      // Predicated region
      $region70: #{tpu_custom_call.1} parent=5 // pred_check
        _
      $region71: #{tpu_custom_call.1} parent=5 // pred_check_branch
        %241 = sbr.rel (%p238) target = $region73
      $region72: #{tpu_custom_call.1} parent=5 // pred_region
        %s242 = ssub.s32 %s13, 1
        %s243 = sand.u32 %s40, 1
        %s244 = sand.u32 %s40, 1
        %s245 = smul.addr %s244, 16
        %s246 = scalar_lea.vmem [#allocation2], %s245
        // Predicated region
        $region74: #{tpu_custom_call.1} parent=72 // pred_check
          %p247 = pneg %p53
        $region75: #{tpu_custom_call.1} parent=72 // pred_check_branch
          %249 = sbr.rel (%p247) target = $region77
        $region76: #{tpu_custom_call.1} parent=72 // pred_region
          _
        $region77: #{tpu_custom_call.1} parent=72 // pred_fallthru
          _
        %s250 = sand.u32 %s40, 1
        %s251 = sand.u32 %s40, 1
        %s252 = smul.addr %s251, 16
        %s253 = scalar_lea.vmem [#allocation2], %s252
        %p254 = pneg %p53
        %p255 = pneg %p50
        %p256 = pneg %p74
        %p257 = pneg %p71
        %p258 = pneg %p95
        %p259 = pneg %p92
        %p260 = pneg %p116
        %p261 = pneg %p113
        %p262 = pneg %p144
        %p263 = pneg %p141
        %s264 = sand.u32 %s131, 1
        %s265 = scalar_lea.sflag [#allocation4], %s264
        %s266 = sand.u32 %s131, 1
        %s267 = smul.addr %s266, 16
        %s268 = scalar_lea.vmem [#allocation3], %s267
        %v270 = vld [vmem:[%s246] sm:$0xf]
        %v271 = vld [vmem:[%s246 + $0x4] sm:$0xf]
        %v272 = vld [vmem:[%s246 + $0x8] sm:$0xf]
        %v273 = vld [vmem:[%s246 + $0xc] sm:$0xf]
        %v274 = vunpack.c.l.bf16 %v270
        %v275 = vunpack.c.l.bf16 %v271
        %v276 = vunpack.c.l.bf16 %v272
        %v277 = vunpack.c.l.bf16 %v273
        %v278 = vld [vmem:[%s1] sm:$0xf]
        %v279 = vld [vmem:[%s1 + $0x4] sm:$0xf]
        %v280 = vld [vmem:[%s1 + $0x8] sm:$0xf]
        %v281 = vld [vmem:[%s1 + $0xc] sm:$0xf]
        %v282 = vld [vmem:[%s3] sm:$0xff]
        %v283 = vld [vmem:[%s3 + $0x8] sm:$0xff]
        %v284 = vld [vmem:[%s3 + $0x10] sm:$0xff]
        %v285 = vld [vmem:[%s3 + $0x18] sm:$0xff]
        %287 = vset.pattern.permute.xlu0 0
        %288 = vperm.xlu0 %287, %v282
        %v289 = vpop.permute.xlu0 %288
        %292 = vset.pattern.permute.xlu0 0
        %293 = vperm.xlu0 %292, %v283
        %v294 = vpop.permute.xlu0 %293
        %297 = vset.pattern.permute.xlu0 0
        %298 = vperm.xlu0 %297, %v284
        %v299 = vpop.permute.xlu0 %298
        %302 = vset.pattern.permute.xlu0 0
        %303 = vperm.xlu0 %302, %v285
        %v304 = vpop.permute.xlu0 %303
        %v310 = vunpack.c.l.b16 %v278
        %v311 = vunpack.c.l.b16 %v279
        %v312 = vunpack.c.l.b16 %v280
        %v313 = vunpack.c.l.b16 %v281
        %v314 = vpack.c.b16 %v311, %v310
        %v315 = vpack.c.b16 %v313, %v312
        %v320 = vunpack.c.l.b16 %v270
        %v321 = vunpack.c.l.b16 %v271
        %v322 = vunpack.c.l.b16 %v272
        %v323 = vunpack.c.l.b16 %v273
        %v324 = vpack.c.b16 %v321, %v320
        %v325 = vpack.c.b16 %v323, %v322
        %vm328 = vcmask 261120
        %v330 = vsel %vm328, %v314, 0
        %v333 = vsel %vm328, %v315, 0
        %335 = vmatprep.subr.bf16.mxu0 0
        %336 = vmatpush1.bf16.msra.mxu0 0
        %337 = vmatprep.subr.bf16.mxu0 0
        %338 = vmatpush1.bf16.msra.mxu0 0
        %339 = vmatprep.subr.bf16.mxu0 0
        %340 = vmatpush1.bf16.msra.mxu0 0
        %341 = vmatprep.subr.bf16.mxu0 0
        %342 = vmatpush1.bf16.msra.mxu0 0
        %343 = vmatprep.subr.bf16.mxu0 0
        %344 = vmatpush1.bf16.msra.mxu0 0
        %345 = vmatprep.subr.bf16.mxu0 0
        %346 = vmatpush1.bf16.msra.mxu0 0
        %347 = vmatprep.subr.bf16.mxu0 0
        %348 = vmatpush1.bf16.msra.mxu0 %v325
        %349 = vmatprep.subr.bf16.mxu0 0
        %350 = vmatpush1.bf16.msra.mxu0 %v324
        %351 = vmatprep.subr.bf16.mxu0 0
        %352 = vmatpush2.bf16.msra.mxu0 0
        %353 = vmatprep.subr.bf16.mxu0 0
        %354 = vmatpush2.bf16.msra.mxu0 0
        %355 = vmatprep.subr.bf16.mxu0 0
        %356 = vmatpush2.bf16.msra.mxu0 0
        %357 = vmatprep.subr.bf16.mxu0 0
        %358 = vmatpush2.bf16.msra.mxu0 0
        %359 = vmatprep.subr.bf16.mxu0 0
        %360 = vmatpush2.bf16.msra.mxu0 0
        %361 = vmatprep.subr.bf16.mxu0 0
        %362 = vmatpush2.bf16.msra.mxu0 0
        %363 = vmatprep.subr.bf16.mxu0 0
        %364 = vmatpush2.bf16.msra.mxu0 0
        %365 = vmatprep.subr.bf16.mxu0 0
        %366 = vmatpush2.bf16.msra.mxu0 0
        %367 = vmatprep.mubr.bf16.mxu0 0
        %368 = vmatmul.mubr.bf16.gmra.mxu0 %v330
        %v369 = vpop.f32.mrf.mxu0
        %v370 = vadd.f32 %v289, %v369
        %v371 = vpop.f32.mrf.mxu0
        %v372 = vpop.f32.mrf.mxu0
        %v373 = vadd.f32 %v294, %v372
        %v374 = vpop.f32.mrf.mxu0
        %375 = vmatprep.mubr.bf16.mxu0 0
        %376 = vmatmul.mubr.bf16.gmra.mxu0 %v333
        %v377 = vpop.f32.mrf.mxu0
        %v378 = vadd.f32 %v299, %v377
        %v379 = vpop.f32.mrf.mxu0
        %v380 = vpop.f32.mrf.mxu0
        %v381 = vadd.f32 %v304, %v380
        %v382 = vpop.f32.mrf.mxu0
        %383 = vdwg.mxu0
        %v384 = vmax.f32 %v370, 0.0
        %v385 = vmax.f32 %v373, 0.0
        %v386 = vmax.f32 %v378, 0.0
        %v387 = vmax.f32 %v381, 0.0
        %v388 = vld [vmem:[%s2] sm:$0xf]
        %v389 = vld [vmem:[%s2 + $0x4] sm:$0xf]
        %v390 = vld [vmem:[%s2 + $0x8] sm:$0xf]
        %v391 = vld [vmem:[%s2 + $0xc] sm:$0xf]
        %v392 = vpack.c.bf16 %v385, %v384
        %v393 = vpack.c.bf16 %v387, %v386
        %s394 = scalar_lea.vmem %s3, 32
        %v395 = vld [vmem:[%s394] sm:$0xff]
        %v396 = vld [vmem:[%s394 + $0x8] sm:$0xff]
        %v397 = vld [vmem:[%s394 + $0x10] sm:$0xff]
        %v398 = vld [vmem:[%s394 + $0x18] sm:$0xff]
        %400 = vset.pattern.permute.xlu0 0
        %401 = vperm.xlu0 %400, %v395
        %v402 = vpop.permute.xlu0 %401
        %405 = vset.pattern.permute.xlu0 0
        %406 = vperm.xlu0 %405, %v396
        %v407 = vpop.permute.xlu0 %406
        %410 = vset.pattern.permute.xlu0 0
        %411 = vperm.xlu0 %410, %v397
        %v412 = vpop.permute.xlu0 %411
        %415 = vset.pattern.permute.xlu0 0
        %416 = vperm.xlu0 %415, %v398
        %v417 = vpop.permute.xlu0 %416
        %v423 = vunpack.c.l.b16 %v388
        %v424 = vunpack.c.l.b16 %v389
        %v425 = vunpack.c.l.b16 %v390
        %v426 = vunpack.c.l.b16 %v391
        %v427 = vpack.c.b16 %v424, %v423
        %v428 = vpack.c.b16 %v426, %v425
        %v430 = vsel %vm328, %v427, 0
        %v433 = vsel %vm328, %v428, 0
        %435 = vmatprep.subr.bf16.mxu0 0
        %436 = vmatpush1.bf16.msra.mxu0 0
        %437 = vmatprep.subr.bf16.mxu0 0
        %438 = vmatpush1.bf16.msra.mxu0 0
        %439 = vmatprep.subr.bf16.mxu0 0
        %440 = vmatpush1.bf16.msra.mxu0 0
        %441 = vmatprep.subr.bf16.mxu0 0
        %442 = vmatpush1.bf16.msra.mxu0 0
        %443 = vmatprep.subr.bf16.mxu0 0
        %444 = vmatpush1.bf16.msra.mxu0 0
        %445 = vmatprep.subr.bf16.mxu0 0
        %446 = vmatpush1.bf16.msra.mxu0 0
        %447 = vmatprep.subr.bf16.mxu0 0
        %448 = vmatpush1.bf16.msra.mxu0 %v393
        %449 = vmatprep.subr.bf16.mxu0 0
        %450 = vmatpush1.bf16.msra.mxu0 %v392
        %451 = vmatprep.subr.bf16.mxu0 0
        %452 = vmatpush2.bf16.msra.mxu0 0
        %453 = vmatprep.subr.bf16.mxu0 0
        %454 = vmatpush2.bf16.msra.mxu0 0
        %455 = vmatprep.subr.bf16.mxu0 0
        %456 = vmatpush2.bf16.msra.mxu0 0
        %457 = vmatprep.subr.bf16.mxu0 0
        %458 = vmatpush2.bf16.msra.mxu0 0
        %459 = vmatprep.subr.bf16.mxu0 0
        %460 = vmatpush2.bf16.msra.mxu0 0
        %461 = vmatprep.subr.bf16.mxu0 0
        %462 = vmatpush2.bf16.msra.mxu0 0
        %463 = vmatprep.subr.bf16.mxu0 0
        %464 = vmatpush2.bf16.msra.mxu0 0
        %465 = vmatprep.subr.bf16.mxu0 0
        %466 = vmatpush2.bf16.msra.mxu0 0
        %467 = vmatprep.mubr.bf16.mxu0 0
        %468 = vmatmul.mubr.bf16.gmra.mxu0 %v430
        %v469 = vpop.f32.mrf.mxu0
        %v470 = vadd.f32 %v402, %v469
        %v471 = vpop.f32.mrf.mxu0
        %v472 = vpop.f32.mrf.mxu0
        %v473 = vadd.f32 %v407, %v472
        %v474 = vpop.f32.mrf.mxu0
        %475 = vmatprep.mubr.bf16.mxu0 0
        %476 = vmatmul.mubr.bf16.gmra.mxu0 %v433
        %v477 = vpop.f32.mrf.mxu0
        %v478 = vadd.f32 %v412, %v477
        %v479 = vpop.f32.mrf.mxu0
        %v480 = vpop.f32.mrf.mxu0
        %v481 = vadd.f32 %v417, %v480
        %v482 = vpop.f32.mrf.mxu0
        %483 = vdwg.mxu0
        %v484 = vadd.f32 %v274, %v470
        %v485 = vadd.f32 %v275, %v473
        %v486 = vadd.f32 %v276, %v478
        %v487 = vadd.f32 %v277, %v481
        %s488 = scalar_lea.vmem %s1, 16
        %v489 = vld [vmem:[%s488] sm:$0xf]
        %v490 = vld [vmem:[%s488 + $0x4] sm:$0xf]
        %v491 = vld [vmem:[%s488 + $0x8] sm:$0xf]
        %v492 = vld [vmem:[%s488 + $0xc] sm:$0xf]
        %v493 = vpack.c.bf16 %v485, %v484
        %v494 = vpack.c.bf16 %v487, %v486
        %s495 = scalar_lea.vmem %s3, 64
        %v496 = vld [vmem:[%s495] sm:$0xff]
        %v497 = vld [vmem:[%s495 + $0x8] sm:$0xff]
        %v498 = vld [vmem:[%s495 + $0x10] sm:$0xff]
        %v499 = vld [vmem:[%s495 + $0x18] sm:$0xff]
        %501 = vset.pattern.permute.xlu0 0
        %502 = vperm.xlu0 %501, %v496
        %v503 = vpop.permute.xlu0 %502
        %506 = vset.pattern.permute.xlu0 0
        %507 = vperm.xlu0 %506, %v497
        %v508 = vpop.permute.xlu0 %507
        %511 = vset.pattern.permute.xlu0 0
        %512 = vperm.xlu0 %511, %v498
        %v513 = vpop.permute.xlu0 %512
        %516 = vset.pattern.permute.xlu0 0
        %517 = vperm.xlu0 %516, %v499
        %v518 = vpop.permute.xlu0 %517
        %v524 = vunpack.c.l.b16 %v489
        %v525 = vunpack.c.l.b16 %v490
        %v526 = vunpack.c.l.b16 %v491
        %v527 = vunpack.c.l.b16 %v492
        %v528 = vpack.c.b16 %v525, %v524
        %v529 = vpack.c.b16 %v527, %v526
        %v531 = vsel %vm328, %v528, 0
        %v534 = vsel %vm328, %v529, 0
        %536 = vmatprep.subr.bf16.mxu0 0
        %537 = vmatpush1.bf16.msra.mxu0 0
        %538 = vmatprep.subr.bf16.mxu0 0
        %539 = vmatpush1.bf16.msra.mxu0 0
        %540 = vmatprep.subr.bf16.mxu0 0
        %541 = vmatpush1.bf16.msra.mxu0 0
        %542 = vmatprep.subr.bf16.mxu0 0
        %543 = vmatpush1.bf16.msra.mxu0 0
        %544 = vmatprep.subr.bf16.mxu0 0
        %545 = vmatpush1.bf16.msra.mxu0 0
        %546 = vmatprep.subr.bf16.mxu0 0
        %547 = vmatpush1.bf16.msra.mxu0 0
        %548 = vmatprep.subr.bf16.mxu0 0
        %549 = vmatpush1.bf16.msra.mxu0 %v494
        %550 = vmatprep.subr.bf16.mxu0 0
        %551 = vmatpush1.bf16.msra.mxu0 %v493
        %552 = vmatprep.subr.bf16.mxu0 0
        %553 = vmatpush2.bf16.msra.mxu0 0
        %554 = vmatprep.subr.bf16.mxu0 0
        %555 = vmatpush2.bf16.msra.mxu0 0
        %556 = vmatprep.subr.bf16.mxu0 0
        %557 = vmatpush2.bf16.msra.mxu0 0
        %558 = vmatprep.subr.bf16.mxu0 0
        %559 = vmatpush2.bf16.msra.mxu0 0
        %560 = vmatprep.subr.bf16.mxu0 0
        %561 = vmatpush2.bf16.msra.mxu0 0
        %562 = vmatprep.subr.bf16.mxu0 0
        %563 = vmatpush2.bf16.msra.mxu0 0
        %564 = vmatprep.subr.bf16.mxu0 0
        %565 = vmatpush2.bf16.msra.mxu0 0
        %566 = vmatprep.subr.bf16.mxu0 0
        %567 = vmatpush2.bf16.msra.mxu0 0
        %568 = vmatprep.mubr.bf16.mxu0 0
        %569 = vmatmul.mubr.bf16.gmra.mxu0 %v531
        %v570 = vpop.f32.mrf.mxu0
        %v571 = vadd.f32 %v503, %v570
        %v572 = vpop.f32.mrf.mxu0
        %v573 = vpop.f32.mrf.mxu0
        %v574 = vadd.f32 %v508, %v573
        %v575 = vpop.f32.mrf.mxu0
        %576 = vmatprep.mubr.bf16.mxu0 0
        %577 = vmatmul.mubr.bf16.gmra.mxu0 %v534
        %v578 = vpop.f32.mrf.mxu0
        %v579 = vadd.f32 %v513, %v578
        %v580 = vpop.f32.mrf.mxu0
        %v581 = vpop.f32.mrf.mxu0
        %v582 = vadd.f32 %v518, %v581
        %v583 = vpop.f32.mrf.mxu0
        %584 = vdwg.mxu0
        %v585 = vmax.f32 %v571, 0.0
        %v586 = vmax.f32 %v574, 0.0
        %v587 = vmax.f32 %v579, 0.0
        %v588 = vmax.f32 %v582, 0.0
        %s589 = scalar_lea.vmem %s2, 16
        %v590 = vld [vmem:[%s589] sm:$0xf]
        %v591 = vld [vmem:[%s589 + $0x4] sm:$0xf]
        %v592 = vld [vmem:[%s589 + $0x8] sm:$0xf]
        %v593 = vld [vmem:[%s589 + $0xc] sm:$0xf]
        %v594 = vpack.c.bf16 %v586, %v585
        %v595 = vpack.c.bf16 %v588, %v587
        %s596 = scalar_lea.vmem %s3, 96
        %v597 = vld [vmem:[%s596] sm:$0xff]
        %v598 = vld [vmem:[%s596 + $0x8] sm:$0xff]
        %v599 = vld [vmem:[%s596 + $0x10] sm:$0xff]
        %v600 = vld [vmem:[%s596 + $0x18] sm:$0xff]
        %602 = vset.pattern.permute.xlu0 0
        %603 = vperm.xlu0 %602, %v597
        %v604 = vpop.permute.xlu0 %603
        %607 = vset.pattern.permute.xlu0 0
        %608 = vperm.xlu0 %607, %v598
        %v609 = vpop.permute.xlu0 %608
        %612 = vset.pattern.permute.xlu0 0
        %613 = vperm.xlu0 %612, %v599
        %v614 = vpop.permute.xlu0 %613
        %617 = vset.pattern.permute.xlu0 0
        %618 = vperm.xlu0 %617, %v600
        %v619 = vpop.permute.xlu0 %618
        %v625 = vunpack.c.l.b16 %v590
        %v626 = vunpack.c.l.b16 %v591
        %v627 = vunpack.c.l.b16 %v592
        %v628 = vunpack.c.l.b16 %v593
        %v629 = vpack.c.b16 %v626, %v625
        %v630 = vpack.c.b16 %v628, %v627
        %v632 = vsel %vm328, %v629, 0
        %v635 = vsel %vm328, %v630, 0
        %637 = vmatprep.subr.bf16.mxu0 0
        %638 = vmatpush1.bf16.msra.mxu0 0
        %639 = vmatprep.subr.bf16.mxu0 0
        %640 = vmatpush1.bf16.msra.mxu0 0
        %641 = vmatprep.subr.bf16.mxu0 0
        %642 = vmatpush1.bf16.msra.mxu0 0
        %643 = vmatprep.subr.bf16.mxu0 0
        %644 = vmatpush1.bf16.msra.mxu0 0
        %645 = vmatprep.subr.bf16.mxu0 0
        %646 = vmatpush1.bf16.msra.mxu0 0
        %647 = vmatprep.subr.bf16.mxu0 0
        %648 = vmatpush1.bf16.msra.mxu0 0
        %649 = vmatprep.subr.bf16.mxu0 0
        %650 = vmatpush1.bf16.msra.mxu0 %v595
        %651 = vmatprep.subr.bf16.mxu0 0
        %652 = vmatpush1.bf16.msra.mxu0 %v594
        %653 = vmatprep.subr.bf16.mxu0 0
        %654 = vmatpush2.bf16.msra.mxu0 0
        %655 = vmatprep.subr.bf16.mxu0 0
        %656 = vmatpush2.bf16.msra.mxu0 0
        %657 = vmatprep.subr.bf16.mxu0 0
        %658 = vmatpush2.bf16.msra.mxu0 0
        %659 = vmatprep.subr.bf16.mxu0 0
        %660 = vmatpush2.bf16.msra.mxu0 0
        %661 = vmatprep.subr.bf16.mxu0 0
        %662 = vmatpush2.bf16.msra.mxu0 0
        %663 = vmatprep.subr.bf16.mxu0 0
        %664 = vmatpush2.bf16.msra.mxu0 0
        %665 = vmatprep.subr.bf16.mxu0 0
        %666 = vmatpush2.bf16.msra.mxu0 0
        %667 = vmatprep.subr.bf16.mxu0 0
        %668 = vmatpush2.bf16.msra.mxu0 0
        %669 = vmatprep.mubr.bf16.mxu0 0
        %670 = vmatmul.mubr.bf16.gmra.mxu0 %v632
        %v671 = vpop.f32.mrf.mxu0
        %v672 = vadd.f32 %v604, %v671
        %v673 = vpop.f32.mrf.mxu0
        %v674 = vpop.f32.mrf.mxu0
        %v675 = vadd.f32 %v609, %v674
        %v676 = vpop.f32.mrf.mxu0
        %677 = vmatprep.mubr.bf16.mxu0 0
        %678 = vmatmul.mubr.bf16.gmra.mxu0 %v635
        %v679 = vpop.f32.mrf.mxu0
        %v680 = vadd.f32 %v614, %v679
        %v681 = vpop.f32.mrf.mxu0
        %v682 = vpop.f32.mrf.mxu0
        %v683 = vadd.f32 %v619, %v682
        %v684 = vpop.f32.mrf.mxu0
        %685 = vdwg.mxu0
        %v686 = vadd.f32 %v484, %v672
        %v687 = vadd.f32 %v485, %v675
        %v688 = vadd.f32 %v486, %v680
        %v689 = vadd.f32 %v487, %v683
        %s690 = scalar_lea.vmem %s1, 32
        %v691 = vld [vmem:[%s690] sm:$0xf]
        %v692 = vld [vmem:[%s690 + $0x4] sm:$0xf]
        %v693 = vld [vmem:[%s690 + $0x8] sm:$0xf]
        %v694 = vld [vmem:[%s690 + $0xc] sm:$0xf]
        %v695 = vpack.c.bf16 %v687, %v686
        %v696 = vpack.c.bf16 %v689, %v688
        %s697 = scalar_lea.vmem %s3, 128
        %v698 = vld [vmem:[%s697] sm:$0xff]
        %v699 = vld [vmem:[%s697 + $0x8] sm:$0xff]
        %v700 = vld [vmem:[%s697 + $0x10] sm:$0xff]
        %v701 = vld [vmem:[%s697 + $0x18] sm:$0xff]
        %703 = vset.pattern.permute.xlu0 0
        %704 = vperm.xlu0 %703, %v698
        %v705 = vpop.permute.xlu0 %704
        %708 = vset.pattern.permute.xlu0 0
        %709 = vperm.xlu0 %708, %v699
        %v710 = vpop.permute.xlu0 %709
        %713 = vset.pattern.permute.xlu0 0
        %714 = vperm.xlu0 %713, %v700
        %v715 = vpop.permute.xlu0 %714
        %718 = vset.pattern.permute.xlu0 0
        %719 = vperm.xlu0 %718, %v701
        %v720 = vpop.permute.xlu0 %719
        %v726 = vunpack.c.l.b16 %v691
        %v727 = vunpack.c.l.b16 %v692
        %v728 = vunpack.c.l.b16 %v693
        %v729 = vunpack.c.l.b16 %v694
        %v730 = vpack.c.b16 %v727, %v726
        %v731 = vpack.c.b16 %v729, %v728
        %v733 = vsel %vm328, %v730, 0
        %v736 = vsel %vm328, %v731, 0
        %738 = vmatprep.subr.bf16.mxu0 0
        %739 = vmatpush1.bf16.msra.mxu0 0
        %740 = vmatprep.subr.bf16.mxu0 0
        %741 = vmatpush1.bf16.msra.mxu0 0
        %742 = vmatprep.subr.bf16.mxu0 0
        %743 = vmatpush1.bf16.msra.mxu0 0
        %744 = vmatprep.subr.bf16.mxu0 0
        %745 = vmatpush1.bf16.msra.mxu0 0
        %746 = vmatprep.subr.bf16.mxu0 0
        %747 = vmatpush1.bf16.msra.mxu0 0
        %748 = vmatprep.subr.bf16.mxu0 0
        %749 = vmatpush1.bf16.msra.mxu0 0
        %750 = vmatprep.subr.bf16.mxu0 0
        %751 = vmatpush1.bf16.msra.mxu0 %v696
        %752 = vmatprep.subr.bf16.mxu0 0
        %753 = vmatpush1.bf16.msra.mxu0 %v695
        %754 = vmatprep.subr.bf16.mxu0 0
        %755 = vmatpush2.bf16.msra.mxu0 0
        %756 = vmatprep.subr.bf16.mxu0 0
        %757 = vmatpush2.bf16.msra.mxu0 0
        %758 = vmatprep.subr.bf16.mxu0 0
        %759 = vmatpush2.bf16.msra.mxu0 0
        %760 = vmatprep.subr.bf16.mxu0 0
        %761 = vmatpush2.bf16.msra.mxu0 0
        %762 = vmatprep.subr.bf16.mxu0 0
        %763 = vmatpush2.bf16.msra.mxu0 0
        %764 = vmatprep.subr.bf16.mxu0 0
        %765 = vmatpush2.bf16.msra.mxu0 0
        %766 = vmatprep.subr.bf16.mxu0 0
        %767 = vmatpush2.bf16.msra.mxu0 0
        %768 = vmatprep.subr.bf16.mxu0 0
        %769 = vmatpush2.bf16.msra.mxu0 0
        %770 = vmatprep.mubr.bf16.mxu0 0
        %771 = vmatmul.mubr.bf16.gmra.mxu0 %v733
        %v772 = vpop.f32.mrf.mxu0
        %v773 = vadd.f32 %v705, %v772
        %v774 = vpop.f32.mrf.mxu0
        %v775 = vpop.f32.mrf.mxu0
        %v776 = vadd.f32 %v710, %v775
        %v777 = vpop.f32.mrf.mxu0
        %778 = vmatprep.mubr.bf16.mxu0 0
        %779 = vmatmul.mubr.bf16.gmra.mxu0 %v736
        %v780 = vpop.f32.mrf.mxu0
        %v781 = vadd.f32 %v715, %v780
        %v782 = vpop.f32.mrf.mxu0
        %v783 = vpop.f32.mrf.mxu0
        %v784 = vadd.f32 %v720, %v783
        %v785 = vpop.f32.mrf.mxu0
        %786 = vdwg.mxu0
        %v787 = vmax.f32 %v773, 0.0
        %v788 = vmax.f32 %v776, 0.0
        %v789 = vmax.f32 %v781, 0.0
        %v790 = vmax.f32 %v784, 0.0
        %s791 = scalar_lea.vmem %s2, 32
        %v792 = vld [vmem:[%s791] sm:$0xf]
        %v793 = vld [vmem:[%s791 + $0x4] sm:$0xf]
        %v794 = vld [vmem:[%s791 + $0x8] sm:$0xf]
        %v795 = vld [vmem:[%s791 + $0xc] sm:$0xf]
        %v796 = vpack.c.bf16 %v788, %v787
        %v797 = vpack.c.bf16 %v790, %v789
        %s798 = scalar_lea.vmem %s3, 160
        %v799 = vld [vmem:[%s798] sm:$0xff]
        %v800 = vld [vmem:[%s798 + $0x8] sm:$0xff]
        %v801 = vld [vmem:[%s798 + $0x10] sm:$0xff]
        %v802 = vld [vmem:[%s798 + $0x18] sm:$0xff]
        %804 = vset.pattern.permute.xlu0 0
        %805 = vperm.xlu0 %804, %v799
        %v806 = vpop.permute.xlu0 %805
        %809 = vset.pattern.permute.xlu0 0
        %810 = vperm.xlu0 %809, %v800
        %v811 = vpop.permute.xlu0 %810
        %814 = vset.pattern.permute.xlu0 0
        %815 = vperm.xlu0 %814, %v801
        %v816 = vpop.permute.xlu0 %815
        %819 = vset.pattern.permute.xlu0 0
        %820 = vperm.xlu0 %819, %v802
        %v821 = vpop.permute.xlu0 %820
        %v827 = vunpack.c.l.b16 %v792
        %v828 = vunpack.c.l.b16 %v793
        %v829 = vunpack.c.l.b16 %v794
        %v830 = vunpack.c.l.b16 %v795
        %v831 = vpack.c.b16 %v828, %v827
        %v832 = vpack.c.b16 %v830, %v829
        %v834 = vsel %vm328, %v831, 0
        %v837 = vsel %vm328, %v832, 0
        %839 = vmatprep.subr.bf16.mxu0 0
        %840 = vmatpush1.bf16.msra.mxu0 0
        %841 = vmatprep.subr.bf16.mxu0 0
        %842 = vmatpush1.bf16.msra.mxu0 0
        %843 = vmatprep.subr.bf16.mxu0 0
        %844 = vmatpush1.bf16.msra.mxu0 0
        %845 = vmatprep.subr.bf16.mxu0 0
        %846 = vmatpush1.bf16.msra.mxu0 0
        %847 = vmatprep.subr.bf16.mxu0 0
        %848 = vmatpush1.bf16.msra.mxu0 0
        %849 = vmatprep.subr.bf16.mxu0 0
        %850 = vmatpush1.bf16.msra.mxu0 0
        %851 = vmatprep.subr.bf16.mxu0 0
        %852 = vmatpush1.bf16.msra.mxu0 %v797
        %853 = vmatprep.subr.bf16.mxu0 0
        %854 = vmatpush1.bf16.msra.mxu0 %v796
        %855 = vmatprep.subr.bf16.mxu0 0
        %856 = vmatpush2.bf16.msra.mxu0 0
        %857 = vmatprep.subr.bf16.mxu0 0
        %858 = vmatpush2.bf16.msra.mxu0 0
        %859 = vmatprep.subr.bf16.mxu0 0
        %860 = vmatpush2.bf16.msra.mxu0 0
        %861 = vmatprep.subr.bf16.mxu0 0
        %862 = vmatpush2.bf16.msra.mxu0 0
        %863 = vmatprep.subr.bf16.mxu0 0
        %864 = vmatpush2.bf16.msra.mxu0 0
        %865 = vmatprep.subr.bf16.mxu0 0
        %866 = vmatpush2.bf16.msra.mxu0 0
        %867 = vmatprep.subr.bf16.mxu0 0
        %868 = vmatpush2.bf16.msra.mxu0 0
        %869 = vmatprep.subr.bf16.mxu0 0
        %870 = vmatpush2.bf16.msra.mxu0 0
        %871 = vmatprep.mubr.bf16.mxu0 0
        %872 = vmatmul.mubr.bf16.gmra.mxu0 %v834
        %v873 = vpop.f32.mrf.mxu0
        %v874 = vadd.f32 %v806, %v873
        %v875 = vpop.f32.mrf.mxu0
        %v876 = vpop.f32.mrf.mxu0
        %v877 = vadd.f32 %v811, %v876
        %v878 = vpop.f32.mrf.mxu0
        %879 = vmatprep.mubr.bf16.mxu0 0
        %880 = vmatmul.mubr.bf16.gmra.mxu0 %v837
        %v881 = vpop.f32.mrf.mxu0
        %v882 = vadd.f32 %v816, %v881
        %v883 = vpop.f32.mrf.mxu0
        %v884 = vpop.f32.mrf.mxu0
        %v885 = vadd.f32 %v821, %v884
        %v886 = vpop.f32.mrf.mxu0
        %887 = vdwg.mxu0
        %v888 = vadd.f32 %v686, %v874
        %v889 = vadd.f32 %v687, %v877
        %v890 = vadd.f32 %v688, %v882
        %v891 = vadd.f32 %v689, %v885
        %v892 = vpack.c.bf16 %v889, %v888
        %v893 = vpack.c.bf16 %v891, %v890
        %v896 = vunpack.c.l.b16 %v892
        %v897 = vunpack.c.h.b16 %v892
        %v898 = vunpack.c.l.b16 %v893
        %v899 = vunpack.c.h.b16 %v893
        %v900 = vpack.c.b16 %v896, %v896
        %v901 = vpack.c.b16 %v897, %v897
        %v902 = vpack.c.b16 %v898, %v898
        %v903 = vpack.c.b16 %v899, %v899
        %908 = vst [vmem:[%s268] sm:$0xf] %v900
        %909 = vst [vmem:[%s268 + $0x4] sm:$0xf] %v901
        %910 = vst [vmem:[%s268 + $0x8] sm:$0xf] %v902
        %911 = vst [vmem:[%s268 + $0xc] sm:$0xf] %v903
        %s912 = sand.u32 %s131, 1
        %s913 = scalar_lea.sflag [#allocation4], %s912
        %s914 = sand.u32 %s131, 1
        %s915 = smul.addr %s914, 16
        %s916 = scalar_lea.vmem [#allocation3], %s915
        // Predicated region
        $region78: #{tpu_custom_call.1} parent=72 // pred_check
          %p917 = pneg %p141
        $region79: #{tpu_custom_call.1} parent=72 // pred_check_branch
          %919 = sbr.rel (%p917) target = $region81
        $region80: #{tpu_custom_call.1} parent=72 // pred_region
          %s921 = ssub.s32 256, 256
          %922 = vsyncadd %s913, %s921
          %s923 = smul.addr %s22, 8
          %s924 = sadd.s32 %s23, %s923
          %s925 = smul.addr %s924, 64
          %s926 = scalar_lea.hbm %s4, %s925
          %s927 = sshll.u32 %s916, 4
          %s928 = int_to_ptr.vmem [resolvable:$true] %s927
          %933 = dma.vmem_to_hbm [thread:$0]  %s928, 256, %s926, %s913, 64, 128, 4
        $region81: #{tpu_custom_call.1} parent=72 // pred_fallthru
          _
      $region73: #{tpu_custom_call.1} parent=5 // pred_fallthru
        _
      %p934 = scmp.le.s32.totalorder 2, %s13
      // Predicated region
      $region82: #{tpu_custom_call.1} parent=5 // pred_check
        %p935 = pneg %p934
      $region83: #{tpu_custom_call.1} parent=5 // pred_check_branch
        %937 = sbr.rel (%p935) target = $region85
      $region84: #{tpu_custom_call.1} parent=5 // pred_region
        %s938 = ssub.s32 %s13, 2
        // Predicated region
        $region86: #{tpu_custom_call.1} parent=84 // pred_check
          %p939 = pneg %p147
        $region87: #{tpu_custom_call.1} parent=84 // pred_check_branch
          %941 = sbr.rel (%p939) target = $region89
        $region88: #{tpu_custom_call.1} parent=84 // pred_region
          %s942 = sand.u32 %s132, 1
          %s943 = scalar_lea.sflag [#allocation4], %s942
          %s944 = sand.u32 %s132, 1
          %s945 = smul.addr %s944, 16
          %s946 = scalar_lea.vmem [#allocation3], %s945
          %947 = dma.done %s943, 256
        $region89: #{tpu_custom_call.1} parent=84 // pred_fallthru
          _
      $region85: #{tpu_custom_call.1} parent=5 // pred_fallthru
        _
    $region6: #{tpu_custom_call.1} parent=1 // loop_footer
      %s17 = sadd.s32 1, %s13
    $region7: #{tpu_custom_call.1} parent=1 // loop_footer_branch
      %12 = sbr.rel target = $region3
    $region8: #{tpu_custom_call.1} parent=1 // loop_exit
      _
    %948 = vsyncpa [#allocation4], 1
    %s949 = scalar_lea.sflag [#allocation4], 1
    %950 = vsyncpa %s949, 1

// kernel: tpu_custom_call.1
$region0: #{tpu_custom_call.1}
  #allocation0 [shape = 'u32[]', space=smem, size = 0x4, offset = 0x4, fixed_abs, tag = 'smem constant byte address 0x4 - core index']
  #allocation1 [shape = 'u32[144,128]{1,0:T(1,128)}', space=vmem, size = 0x12000, scoped, tag = 'internal scratch']
  %s0 = inlined_call_operand.vmem [shape: bf16[2,32,160], index: 0, kind: input, shape index: {}]
  %s1 = inlined_call_operand.vmem [shape: bf16[3,32,32], index: 1, kind: input, shape index: {}]
  %s2 = inlined_call_operand.vmem [shape: bf16[3,32,32], index: 2, kind: input, shape index: {}]
  %s3 = inlined_call_operand.vmem [shape: f32[3,2,32,1], index: 3, kind: input, shape index: {}]
  %s4 = inlined_call_operand.hbm [shape: bf16[2,32,160], index: 4, kind: output, shape index: {}]
  %s5 = sld [smem:[#allocation0]]
  $region90: #{tpu_custom_call.1} parent=0
    _
  %s7 = ssub.s32 1, %s5
  %s8 = scalar_select 0, %s7, %s5
  $region1: #{tpu_custom_call.1} parent=0
    #allocation2 [shape = 'u8[16384]{0}', space=vmem, size = 0x4000, scoped, tag = 'input window, operand 0']
    #allocation3 [shape = 'u8[16384]{0}', space=vmem, size = 0x4000, scoped, tag = 'output window, operand 0']
    #allocation4 [shape = 's32[2]{0}', space=sflag, size = 0x8, scoped, tag = 'scoped memory for tpu_custom_call.1']
    %9 = vsyncpa [#allocation4], 0
    %s10 = scalar_lea.sflag [#allocation4], 1
    %11 = vsyncpa %s10, 0
    loop: start=0, step=1, limit=6
    $region2: #{tpu_custom_call.1} parent=1 // loop_pre_header
      _
    $region3: #{tpu_custom_call.1} parent=1 // loop_header
      %s13 = sphi 0, %s17
      %p14 = scmp.ge.s32.totalorder %s13, 6
      %s20 = sphi 0, %s32
      %s21 = sphi 0, %s28
      %s22 = sphi 0, %s20
      %s23 = sphi 0, %s21
      %s24 = sphi 0, %s22
      %s25 = sphi 0, %s23
      %s37 = sphi 0, %s39
      %s40 = sphi 0, %s37
      %s41 = sphi 0, %s40
      %s57 = sphi 0, %s41
      %s61 = sphi 0, %s61
      %s63 = sphi 0, %s61
      %s64 = sphi 0, %s63
      %s78 = sphi 0, %s64
      %s82 = sphi 0, %s82
      %s84 = sphi 0, %s82
      %s85 = sphi 0, %s84
      %s99 = sphi 0, %s85
      %s103 = sphi 0, %s103
      %s105 = sphi 0, %s103
      %s106 = sphi 0, %s105
      %s120 = sphi 0, %s106
      %s128 = sphi 0, %s130
      %s131 = sphi 0, %s128
      %s132 = sphi 0, %s131
      %s148 = sphi 0, %s132
    $region4: #{tpu_custom_call.1} parent=1 // loop_header_branch
      %16 = sbr.rel (%p14) target = $region8
    $region5: #{tpu_custom_call.1} parent=1 // loop_body
      %s18 = ssub.s32 %s13, 1
      %s19 = ssub.s32 %s13, 2
      %s26 = sadd.s32 1, %s21
      %p27 = scmp.ge.s32.totalorder %s26, 2
      %s28 = scalar_select %p27, 0, %s26
      %s29 = sadd.s32 1, %s20
      %s30 = scalar_select %p27, %s29, %s20
      %p31 = scmp.ge.s32.totalorder %s30, 2
      %s32 = scalar_select %p31, 0, %s30
      %s33 = ssub.s32 %s20, %s32
      %s34 = ssub.s32 %s21, %s28
      %s35 = sor.u32 %s33, %s34
      %p36 = scmp.eq.s32.totalorder %s35, 0
      %s38 = sadd.s32 %s37, 1
      %s39 = scalar_select %p36, %s37, %s38
      %p42 = pneg %p36
      %p43 = scmp.eq.s32.totalorder %s13, 3
      %p44 = por %p42, %p43
      %p45 = scmp.ne.s32.totalorder %s37, %s40
      %p46 = scmp.eq.s32.totalorder %s13, 0
      %p47 = por %p45, %p46
      %p48 = scmp.ne.s32.totalorder %s37, %s40
      %p49 = scmp.eq.s32.totalorder %s18, 3
      %p50 = por %p48, %p49
      %p51 = scmp.ne.s32.totalorder %s40, %s41
      %p52 = scmp.eq.s32.totalorder %s18, 0
      %p53 = por %p51, %p52
      %p54 = scmp.ne.s32.totalorder %s40, %s41
      %p55 = scmp.eq.s32.totalorder %s19, 3
      %p56 = por %p54, %p55
      %p58 = scmp.ne.s32.totalorder %s41, %s57
      %p59 = scmp.eq.s32.totalorder %s19, 0
      %p60 = por %p58, %p59
      %s62 = sadd.s32 %s61, 1
      %p65 = scmp.eq.s32.totalorder %s13, 3
      %p66 = scmp.ne.s32.totalorder %s61, %s63
      %p67 = scmp.eq.s32.totalorder %s13, 0
      %p68 = por %p66, %p67
      %p69 = scmp.ne.s32.totalorder %s61, %s63
      %p70 = scmp.eq.s32.totalorder %s18, 3
      %p71 = por %p69, %p70
      %p72 = scmp.ne.s32.totalorder %s63, %s64
      %p73 = scmp.eq.s32.totalorder %s18, 0
      %p74 = por %p72, %p73
      %p75 = scmp.ne.s32.totalorder %s63, %s64
      %p76 = scmp.eq.s32.totalorder %s19, 3
      %p77 = por %p75, %p76
      %p79 = scmp.ne.s32.totalorder %s64, %s78
      %p80 = scmp.eq.s32.totalorder %s19, 0
      %p81 = por %p79, %p80
      %s83 = sadd.s32 %s82, 1
      %p86 = scmp.eq.s32.totalorder %s13, 3
      %p87 = scmp.ne.s32.totalorder %s82, %s84
      %p88 = scmp.eq.s32.totalorder %s13, 0
      %p89 = por %p87, %p88
      %p90 = scmp.ne.s32.totalorder %s82, %s84
      %p91 = scmp.eq.s32.totalorder %s18, 3
      %p92 = por %p90, %p91
      %p93 = scmp.ne.s32.totalorder %s84, %s85
      %p94 = scmp.eq.s32.totalorder %s18, 0
      %p95 = por %p93, %p94
      %p96 = scmp.ne.s32.totalorder %s84, %s85
      %p97 = scmp.eq.s32.totalorder %s19, 3
      %p98 = por %p96, %p97
      %p100 = scmp.ne.s32.totalorder %s85, %s99
      %p101 = scmp.eq.s32.totalorder %s19, 0
      %p102 = por %p100, %p101
      %s104 = sadd.s32 %s103, 1
      %p107 = scmp.eq.s32.totalorder %s13, 3
      %p108 = scmp.ne.s32.totalorder %s103, %s105
      %p109 = scmp.eq.s32.totalorder %s13, 0
      %p110 = por %p108, %p109
      %p111 = scmp.ne.s32.totalorder %s103, %s105
      %p112 = scmp.eq.s32.totalorder %s18, 3
      %p113 = por %p111, %p112
      %p114 = scmp.ne.s32.totalorder %s105, %s106
      %p115 = scmp.eq.s32.totalorder %s18, 0
      %p116 = por %p114, %p115
      %p117 = scmp.ne.s32.totalorder %s105, %s106
      %p118 = scmp.eq.s32.totalorder %s19, 3
      %p119 = por %p117, %p118
      %p121 = scmp.ne.s32.totalorder %s106, %s120
      %p122 = scmp.eq.s32.totalorder %s19, 0
      %p123 = por %p121, %p122
      %s124 = ssub.s32 %s20, %s32
      %s125 = ssub.s32 %s21, %s28
      %s126 = sor.u32 %s124, %s125
      %p127 = scmp.eq.s32.totalorder %s126, 0
      %s129 = sadd.s32 %s128, 1
      %s130 = scalar_select %p127, %s128, %s129
      %p133 = pneg %p127
      %p134 = scmp.eq.s32.totalorder %s13, 3
      %p135 = por %p133, %p134
      %p136 = scmp.ne.s32.totalorder %s128, %s131
      %p137 = scmp.eq.s32.totalorder %s13, 0
      %p138 = por %p136, %p137
      %p139 = scmp.ne.s32.totalorder %s128, %s131
      %p140 = scmp.eq.s32.totalorder %s18, 3
      %p141 = por %p139, %p140
      %p142 = scmp.ne.s32.totalorder %s131, %s132
      %p143 = scmp.eq.s32.totalorder %s18, 0
      %p144 = por %p142, %p143
      %p145 = scmp.ne.s32.totalorder %s131, %s132
      %p146 = scmp.eq.s32.totalorder %s19, 3
      %p147 = por %p145, %p146
      %p149 = scmp.ne.s32.totalorder %s132, %s148
      %p150 = scmp.eq.s32.totalorder %s19, 0
      %p151 = por %p149, %p150
      %p152 = scmp.le.s32.totalorder 1, %s13
      %p153 = scmp.lt.s32.totalorder %s13, 5
      %p154 = pnand %p152, %p153
      %p155 = pneg %p154
      // Predicated region
      $region9: #{tpu_custom_call.1} parent=5 // pred_check
        _
      $region10: #{tpu_custom_call.1} parent=5 // pred_check_branch
        %157 = sbr.rel (%p154) target = $region12
      $region11: #{tpu_custom_call.1} parent=5 // pred_region
        %s158 = ssub.s32 %s13, 1
        // Predicated region
        $region13: #{tpu_custom_call.1} parent=11 // pred_check
          %p159 = pneg %p74
        $region14: #{tpu_custom_call.1} parent=11 // pred_check_branch
          %161 = sbr.rel (%p159) target = $region16
        $region15: #{tpu_custom_call.1} parent=11 // pred_region
          _
        $region16: #{tpu_custom_call.1} parent=11 // pred_fallthru
          _
        // Predicated region
        $region17: #{tpu_custom_call.1} parent=11 // pred_check
          %p162 = pneg %p95
        $region18: #{tpu_custom_call.1} parent=11 // pred_check_branch
          %164 = sbr.rel (%p162) target = $region20
        $region19: #{tpu_custom_call.1} parent=11 // pred_region
          _
        $region20: #{tpu_custom_call.1} parent=11 // pred_fallthru
          _
        // Predicated region
        $region21: #{tpu_custom_call.1} parent=11 // pred_check
          %p165 = pneg %p116
        $region22: #{tpu_custom_call.1} parent=11 // pred_check_branch
          %167 = sbr.rel (%p165) target = $region24
        $region23: #{tpu_custom_call.1} parent=11 // pred_region
          _
        $region24: #{tpu_custom_call.1} parent=11 // pred_fallthru
          _
      $region12: #{tpu_custom_call.1} parent=5 // pred_fallthru
        _
      %p168 = scmp.lt.s32.totalorder %s13, 4
      // Predicated region
      $region25: #{tpu_custom_call.1} parent=5 // pred_check
        %p169 = pneg %p168
      $region26: #{tpu_custom_call.1} parent=5 // pred_check_branch
        %171 = sbr.rel (%p169) target = $region28
      $region27: #{tpu_custom_call.1} parent=5 // pred_region
        // Predicated region
        $region29: #{tpu_custom_call.1} parent=27 // pred_check
          %p172 = pneg %p47
        $region30: #{tpu_custom_call.1} parent=27 // pred_check_branch
          %174 = sbr.rel (%p172) target = $region32
        $region31: #{tpu_custom_call.1} parent=27 // pred_region
          %s175 = sand.u32 %s37, 1
          %s176 = sand.u32 %s37, 1
          %s177 = smul.addr %s176, 16
          %s178 = scalar_lea.vmem [#allocation2], %s177
          %s179 = smul.addr %s20, 8
          %s180 = sadd.s32 %s21, %s179
          %s181 = smul.addr %s180, 4
          %s182 = scalar_lea.vmem %s0, %s181
          // Predicated region
          $region33: #{tpu_custom_call.1} parent=31 // pred_check
            _
          $region34: #{tpu_custom_call.1} parent=31 // pred_check_branch
            %184 = sbr.rel (0) target = $region36
          $region35: #{tpu_custom_call.1} parent=31 // pred_region
            // Predicated region
            $region37: #{tpu_custom_call.1} parent=35 // pred_check
              _
            $region38: #{tpu_custom_call.1} parent=35 // pred_check_branch
              %186 = sbr.rel target = $region40
            $region39: #{tpu_custom_call.1} parent=35 // pred_region
              // Predicated region
              $region52: #{tpu_custom_call.1} parent=39 // pred_check
                _
              $region53: #{tpu_custom_call.1} parent=39 // pred_check_branch
                %208 = sbr.rel (0) target = $region55
              $region54: #{tpu_custom_call.1} parent=39 // pred_region
                loop: start=0, step=1, limit=1
                $region56: #{tpu_custom_call.1} parent=54 // loop_pre_header
                  _
                $region57: #{tpu_custom_call.1} parent=54 // loop_header
                  %s210 = sphi 0, %s214
                  %p211 = scmp.ge.s32.totalorder %s210, 1
                  %s215 = sphi %s182, %s182
                  %s216 = sphi %s178, %s178
                $region58: #{tpu_custom_call.1} parent=54 // loop_header_branch
                  %213 = sbr.rel (%p211) target = $region62
                $region59: #{tpu_custom_call.1} parent=54 // loop_body
                  _
                $region60: #{tpu_custom_call.1} parent=54 // loop_footer
                  %s214 = sadd.s32 1, %s210
                $region61: #{tpu_custom_call.1} parent=54 // loop_footer_branch
                  %209 = sbr.rel target = $region57
                $region62: #{tpu_custom_call.1} parent=54 // loop_exit
                  _
                %s218 = ssub.s32 16, 1
                loop: start=0, step=1, limit=1
                $region63: #{tpu_custom_call.1} parent=54 // loop_pre_header
                  _
                $region64: #{tpu_custom_call.1} parent=54 // loop_header
                  %s220 = sphi 0, %s224
                  %p221 = scmp.ge.s32.totalorder %s220, 1
                  %s225 = sphi %s182, %s182
                  %s226 = sphi %s178, %s178
                $region65: #{tpu_custom_call.1} parent=54 // loop_header_branch
                  %223 = sbr.rel (%p221) target = $region69
                $region66: #{tpu_custom_call.1} parent=54 // loop_body
                  %v227 = vld [vmem:[%s225] sm:%s218]
                  %228 = vst [vmem:[%s226] sm:%s218] %v227
                  %v229 = vld [vmem:[%s225 + $0x8] sm:%s218]
                  %230 = vst [vmem:[%s226 + $0x4] sm:%s218] %v229
                  %v231 = vld [vmem:[%s225 + $0x10] sm:%s218]
                  %232 = vst [vmem:[%s226 + $0x8] sm:%s218] %v231
                  %v233 = vld [vmem:[%s225 + $0x18] sm:%s218]
                  %234 = vst [vmem:[%s226 + $0xc] sm:%s218] %v233
                $region67: #{tpu_custom_call.1} parent=54 // loop_footer
                  %s224 = sadd.s32 1, %s220
                $region68: #{tpu_custom_call.1} parent=54 // loop_footer_branch
                  %219 = sbr.rel target = $region64
                $region69: #{tpu_custom_call.1} parent=54 // loop_exit
                  _
              $region55: #{tpu_custom_call.1} parent=39 // pred_fallthru
                _
            $region40: #{tpu_custom_call.1} parent=35 // pred_fallthru
              _
            // Predicated region
            $region41: #{tpu_custom_call.1} parent=35 // pred_check
              _
            $region42: #{tpu_custom_call.1} parent=35 // pred_check_branch
              %188 = sbr.rel (0) target = $region44
            $region43: #{tpu_custom_call.1} parent=35 // pred_region
              %s190 = ssub.s32 16, 1
              loop: start=0, step=1, limit=1
              $region45: #{tpu_custom_call.1} parent=43 // loop_pre_header
                _
              $region46: #{tpu_custom_call.1} parent=43 // loop_header
                %s192 = sphi 0, %s196
                %p193 = scmp.ge.s32.totalorder %s192, 1
                %s197 = sphi %s182, %s182
                %s198 = sphi %s178, %s178
              $region47: #{tpu_custom_call.1} parent=43 // loop_header_branch
                %195 = sbr.rel (%p193) target = $region51
              $region48: #{tpu_custom_call.1} parent=43 // loop_body
                %v199 = vld [vmem:[%s197] sm:%s190]
                %200 = vst [vmem:[%s198] sm:%s190] %v199
                %v201 = vld [vmem:[%s197 + $0x8] sm:%s190]
                %202 = vst [vmem:[%s198 + $0x4] sm:%s190] %v201
                %v203 = vld [vmem:[%s197 + $0x10] sm:%s190]
                %204 = vst [vmem:[%s198 + $0x8] sm:%s190] %v203
                %v205 = vld [vmem:[%s197 + $0x18] sm:%s190]
                %206 = vst [vmem:[%s198 + $0xc] sm:%s190] %v205
              $region49: #{tpu_custom_call.1} parent=43 // loop_footer
                %s196 = sadd.s32 1, %s192
              $region50: #{tpu_custom_call.1} parent=43 // loop_footer_branch
                %191 = sbr.rel target = $region46
              $region51: #{tpu_custom_call.1} parent=43 // loop_exit
                _
            $region44: #{tpu_custom_call.1} parent=35 // pred_fallthru
              _
          $region36: #{tpu_custom_call.1} parent=31 // pred_fallthru
            _
          %235 = vnop
        $region32: #{tpu_custom_call.1} parent=27 // pred_fallthru
          _
      $region28: #{tpu_custom_call.1} parent=5 // pred_fallthru
        _
      %p236 = scmp.le.s32.totalorder 1, %s13
      %p237 = scmp.lt.s32.totalorder %s13, 5
      %p238 = pnand %p236, %p237
      %p239 = pneg %p238
      // Predicated region
      $region70: #{tpu_custom_call.1} parent=5 // pred_check
        _
      $region71: #{tpu_custom_call.1} parent=5 // pred_check_branch
        %241 = sbr.rel (%p238) target = $region73
      $region72: #{tpu_custom_call.1} parent=5 // pred_region
        %s242 = ssub.s32 %s13, 1
        %s243 = sand.u32 %s40, 1
        %s244 = sand.u32 %s40, 1
        %s245 = smul.addr %s244, 16
        %s246 = scalar_lea.vmem [#allocation2], %s245
        // Predicated region
        $region74: #{tpu_custom_call.1} parent=72 // pred_check
          %p247 = pneg %p53
        $region75: #{tpu_custom_call.1} parent=72 // pred_check_branch
          %249 = sbr.rel (%p247) target = $region77
        $region76: #{tpu_custom_call.1} parent=72 // pred_region
          _
        $region77: #{tpu_custom_call.1} parent=72 // pred_fallthru
          _
        %s250 = sand.u32 %s40, 1
        %s251 = sand.u32 %s40, 1
        %s252 = smul.addr %s251, 16
        %s253 = scalar_lea.vmem [#allocation2], %s252
        %p254 = pneg %p53
        %p255 = pneg %p50
        %p256 = pneg %p74
        %p257 = pneg %p71
        %p258 = pneg %p95
        %p259 = pneg %p92
        %p260 = pneg %p116
        %p261 = pneg %p113
        %p262 = pneg %p144
        %p263 = pneg %p141
        %s264 = sand.u32 %s131, 1
        %s265 = scalar_lea.sflag [#allocation4], %s264
        %s266 = sand.u32 %s131, 1
        %s267 = smul.addr %s266, 16
        %s268 = scalar_lea.vmem [#allocation3], %s267
        %v270 = vld [vmem:[%s246] sm:$0xf]
        %v271 = vld [vmem:[%s246 + $0x4] sm:$0xf]
        %v272 = vld [vmem:[%s246 + $0x8] sm:$0xf]
        %v273 = vld [vmem:[%s246 + $0xc] sm:$0xf]
        %v274 = vunpack.c.l.bf16 %v270
        %v275 = vunpack.c.l.bf16 %v271
        %v276 = vunpack.c.l.bf16 %v272
        %v277 = vunpack.c.l.bf16 %v273
        %v278 = vld [vmem:[%s1] sm:$0xf]
        %v279 = vld [vmem:[%s1 + $0x4] sm:$0xf]
        %v280 = vld [vmem:[%s1 + $0x8] sm:$0xf]
        %v281 = vld [vmem:[%s1 + $0xc] sm:$0xf]
        %v282 = vld [vmem:[%s3] sm:$0xff]
        %v283 = vld [vmem:[%s3 + $0x8] sm:$0xff]
        %v284 = vld [vmem:[%s3 + $0x10] sm:$0xff]
        %v285 = vld [vmem:[%s3 + $0x18] sm:$0xff]
        %287 = vset.pattern.permute.xlu0 0
        %288 = vperm.xlu0 %287, %v282
        %v289 = vpop.permute.xlu0 %288
        %292 = vset.pattern.permute.xlu0 0
        %293 = vperm.xlu0 %292, %v283
        %v294 = vpop.permute.xlu0 %293
        %297 = vset.pattern.permute.xlu0 0
        %298 = vperm.xlu0 %297, %v284
        %v299 = vpop.permute.xlu0 %298
        %302 = vset.pattern.permute.xlu0 0
        %303 = vperm.xlu0 %302, %v285
        %v304 = vpop.permute.xlu0 %303
        %v310 = vunpack.c.l.b16 %v278
        %v311 = vunpack.c.l.b16 %v279
        %v312 = vunpack.c.l.b16 %v280
        %v313 = vunpack.c.l.b16 %v281
        %v314 = vpack.c.b16 %v311, %v310
        %v315 = vpack.c.b16 %v313, %v312
        %v320 = vunpack.c.l.b16 %v270
        %v321 = vunpack.c.l.b16 %v271
        %v322 = vunpack.c.l.b16 %v272
        %v323 = vunpack.c.l.b16 %v273
        %v324 = vpack.c.b16 %v321, %v320
        %v325 = vpack.c.b16 %v323, %v322
        %vm328 = vcmask 261120
        %v330 = vsel %vm328, %v314, 0
        %v333 = vsel %vm328, %v315, 0
        %335 = vmatprep.subr.bf16.mxu0 0
        %336 = vmatpush1.bf16.msra.mxu0 0
        %337 = vmatprep.subr.bf16.mxu0 0
        %338 = vmatpush1.bf16.msra.mxu0 0
        %339 = vmatprep.subr.bf16.mxu0 0
        %340 = vmatpush1.bf16.msra.mxu0 0
        %341 = vmatprep.subr.bf16.mxu0 0
        %342 = vmatpush1.bf16.msra.mxu0 0
        %343 = vmatprep.subr.bf16.mxu0 0
        %344 = vmatpush1.bf16.msra.mxu0 0
        %345 = vmatprep.subr.bf16.mxu0 0
        %346 = vmatpush1.bf16.msra.mxu0 0
        %347 = vmatprep.subr.bf16.mxu0 0
        %348 = vmatpush1.bf16.msra.mxu0 %v325
        %349 = vmatprep.subr.bf16.mxu0 0
        %350 = vmatpush1.bf16.msra.mxu0 %v324
        %351 = vmatprep.subr.bf16.mxu0 0
        %352 = vmatpush2.bf16.msra.mxu0 0
        %353 = vmatprep.subr.bf16.mxu0 0
        %354 = vmatpush2.bf16.msra.mxu0 0
        %355 = vmatprep.subr.bf16.mxu0 0
        %356 = vmatpush2.bf16.msra.mxu0 0
        %357 = vmatprep.subr.bf16.mxu0 0
        %358 = vmatpush2.bf16.msra.mxu0 0
        %359 = vmatprep.subr.bf16.mxu0 0
        %360 = vmatpush2.bf16.msra.mxu0 0
        %361 = vmatprep.subr.bf16.mxu0 0
        %362 = vmatpush2.bf16.msra.mxu0 0
        %363 = vmatprep.subr.bf16.mxu0 0
        %364 = vmatpush2.bf16.msra.mxu0 0
        %365 = vmatprep.subr.bf16.mxu0 0
        %366 = vmatpush2.bf16.msra.mxu0 0
        %367 = vmatprep.mubr.bf16.mxu0 0
        %368 = vmatmul.mubr.bf16.gmra.mxu0 %v330
        %v369 = vpop.f32.mrf.mxu0
        %v370 = vadd.f32 %v289, %v369
        %v371 = vpop.f32.mrf.mxu0
        %v372 = vpop.f32.mrf.mxu0
        %v373 = vadd.f32 %v294, %v372
        %v374 = vpop.f32.mrf.mxu0
        %375 = vmatprep.mubr.bf16.mxu0 0
        %376 = vmatmul.mubr.bf16.gmra.mxu0 %v333
        %v377 = vpop.f32.mrf.mxu0
        %v378 = vadd.f32 %v299, %v377
        %v379 = vpop.f32.mrf.mxu0
        %v380 = vpop.f32.mrf.mxu0
        %v381 = vadd.f32 %v304, %v380
        %v382 = vpop.f32.mrf.mxu0
        %383 = vdwg.mxu0
        %v384 = vmax.f32 %v370, 0.0
        %v385 = vmax.f32 %v373, 0.0
        %v386 = vmax.f32 %v378, 0.0
        %v387 = vmax.f32 %v381, 0.0
        %v388 = vld [vmem:[%s2] sm:$0xf]
        %v389 = vld [vmem:[%s2 + $0x4] sm:$0xf]
        %v390 = vld [vmem:[%s2 + $0x8] sm:$0xf]
        %v391 = vld [vmem:[%s2 + $0xc] sm:$0xf]
        %v392 = vpack.c.bf16 %v385, %v384
        %v393 = vpack.c.bf16 %v387, %v386
        %s394 = scalar_lea.vmem %s3, 32
        %v395 = vld [vmem:[%s394] sm:$0xff]
        %v396 = vld [vmem:[%s394 + $0x8] sm:$0xff]
        %v397 = vld [vmem:[%s394 + $0x10] sm:$0xff]
        %v398 = vld [vmem:[%s394 + $0x18] sm:$0xff]
        %400 = vset.pattern.permute.xlu0 0
        %401 = vperm.xlu0 %400, %v395
        %v402 = vpop.permute.xlu0 %401
        %405 = vset.pattern.permute.xlu0 0
        %406 = vperm.xlu0 %405, %v396
        %v407 = vpop.permute.xlu0 %406
        %410 = vset.pattern.permute.xlu0 0
        %411 = vperm.xlu0 %410, %v397
        %v412 = vpop.permute.xlu0 %411
        %415 = vset.pattern.permute.xlu0 0
        %416 = vperm.xlu0 %415, %v398
        %v417 = vpop.permute.xlu0 %416
        %v423 = vunpack.c.l.b16 %v388
        %v424 = vunpack.c.l.b16 %v389
        %v425 = vunpack.c.l.b16 %v390
        %v426 = vunpack.c.l.b16 %v391
        %v427 = vpack.c.b16 %v424, %v423
        %v428 = vpack.c.b16 %v426, %v425
        %v430 = vsel %vm328, %v427, 0
        %v433 = vsel %vm328, %v428, 0
        %435 = vmatprep.subr.bf16.mxu0 0
        %436 = vmatpush1.bf16.msra.mxu0 0
        %437 = vmatprep.subr.bf16.mxu0 0
        %438 = vmatpush1.bf16.msra.mxu0 0
        %439 = vmatprep.subr.bf16.mxu0 0
        %440 = vmatpush1.bf16.msra.mxu0 0
        %441 = vmatprep.subr.bf16.mxu0 0
        %442 = vmatpush1.bf16.msra.mxu0 0
        %443 = vmatprep.subr.bf16.mxu0 0
        %444 = vmatpush1.bf16.msra.mxu0 0
        %445 = vmatprep.subr.bf16.mxu0 0
        %446 = vmatpush1.bf16.msra.mxu0 0
        %447 = vmatprep.subr.bf16.mxu0 0
        %448 = vmatpush1.bf16.msra.mxu0 %v393
        %449 = vmatprep.subr.bf16.mxu0 0
        %450 = vmatpush1.bf16.msra.mxu0 %v392
        %451 = vmatprep.subr.bf16.mxu0 0
        %452 = vmatpush2.bf16.msra.mxu0 0
        %453 = vmatprep.subr.bf16.mxu0 0
        %454 = vmatpush2.bf16.msra.mxu0 0
        %455 = vmatprep.subr.bf16.mxu0 0
        %456 = vmatpush2.bf16.msra.mxu0 0
        %457 = vmatprep.subr.bf16.mxu0 0
        %458 = vmatpush2.bf16.msra.mxu0 0
        %459 = vmatprep.subr.bf16.mxu0 0
        %460 = vmatpush2.bf16.msra.mxu0 0
        %461 = vmatprep.subr.bf16.mxu0 0
        %462 = vmatpush2.bf16.msra.mxu0 0
        %463 = vmatprep.subr.bf16.mxu0 0
        %464 = vmatpush2.bf16.msra.mxu0 0
        %465 = vmatprep.subr.bf16.mxu0 0
        %466 = vmatpush2.bf16.msra.mxu0 0
        %467 = vmatprep.mubr.bf16.mxu0 0
        %468 = vmatmul.mubr.bf16.gmra.mxu0 %v430
        %v469 = vpop.f32.mrf.mxu0
        %v470 = vadd.f32 %v402, %v469
        %v471 = vpop.f32.mrf.mxu0
        %v472 = vpop.f32.mrf.mxu0
        %v473 = vadd.f32 %v407, %v472
        %v474 = vpop.f32.mrf.mxu0
        %475 = vmatprep.mubr.bf16.mxu0 0
        %476 = vmatmul.mubr.bf16.gmra.mxu0 %v433
        %v477 = vpop.f32.mrf.mxu0
        %v478 = vadd.f32 %v412, %v477
        %v479 = vpop.f32.mrf.mxu0
        %v480 = vpop.f32.mrf.mxu0
        %v481 = vadd.f32 %v417, %v480
        %v482 = vpop.f32.mrf.mxu0
        %483 = vdwg.mxu0
        %v484 = vadd.f32 %v274, %v470
        %v485 = vadd.f32 %v275, %v473
        %v486 = vadd.f32 %v276, %v478
        %v487 = vadd.f32 %v277, %v481
        %s488 = scalar_lea.vmem %s1, 16
        %v489 = vld [vmem:[%s488] sm:$0xf]
        %v490 = vld [vmem:[%s488 + $0x4] sm:$0xf]
        %v491 = vld [vmem:[%s488 + $0x8] sm:$0xf]
        %v492 = vld [vmem:[%s488 + $0xc] sm:$0xf]
        %v493 = vpack.c.bf16 %v485, %v484
        %v494 = vpack.c.bf16 %v487, %v486
        %s495 = scalar_lea.vmem %s3, 64
        %v496 = vld [vmem:[%s495] sm:$0xff]
        %v497 = vld [vmem:[%s495 + $0x8] sm:$0xff]
        %v498 = vld [vmem:[%s495 + $0x10] sm:$0xff]
        %v499 = vld [vmem:[%s495 + $0x18] sm:$0xff]
        %501 = vset.pattern.permute.xlu0 0
        %502 = vperm.xlu0 %501, %v496
        %v503 = vpop.permute.xlu0 %502
        %506 = vset.pattern.permute.xlu0 0
        %507 = vperm.xlu0 %506, %v497
        %v508 = vpop.permute.xlu0 %507
        %511 = vset.pattern.permute.xlu0 0
        %512 = vperm.xlu0 %511, %v498
        %v513 = vpop.permute.xlu0 %512
        %516 = vset.pattern.permute.xlu0 0
        %517 = vperm.xlu0 %516, %v499
        %v518 = vpop.permute.xlu0 %517
        %v524 = vunpack.c.l.b16 %v489
        %v525 = vunpack.c.l.b16 %v490
        %v526 = vunpack.c.l.b16 %v491
        %v527 = vunpack.c.l.b16 %v492
        %v528 = vpack.c.b16 %v525, %v524
        %v529 = vpack.c.b16 %v527, %v526
        %v531 = vsel %vm328, %v528, 0
        %v534 = vsel %vm328, %v529, 0
        %536 = vmatprep.subr.bf16.mxu0 0
        %537 = vmatpush1.bf16.msra.mxu0 0
        %538 = vmatprep.subr.bf16.mxu0 0
        %539 = vmatpush1.bf16.msra.mxu0 0
        %540 = vmatprep.subr.bf16.mxu0 0
        %541 = vmatpush1.bf16.msra.mxu0 0
        %542 = vmatprep.subr.bf16.mxu0 0
        %543 = vmatpush1.bf16.msra.mxu0 0
        %544 = vmatprep.subr.bf16.mxu0 0
        %545 = vmatpush1.bf16.msra.mxu0 0
        %546 = vmatprep.subr.bf16.mxu0 0
        %547 = vmatpush1.bf16.msra.mxu0 0
        %548 = vmatprep.subr.bf16.mxu0 0
        %549 = vmatpush1.bf16.msra.mxu0 %v494
        %550 = vmatprep.subr.bf16.mxu0 0
        %551 = vmatpush1.bf16.msra.mxu0 %v493
        %552 = vmatprep.subr.bf16.mxu0 0
        %553 = vmatpush2.bf16.msra.mxu0 0
        %554 = vmatprep.subr.bf16.mxu0 0
        %555 = vmatpush2.bf16.msra.mxu0 0
        %556 = vmatprep.subr.bf16.mxu0 0
        %557 = vmatpush2.bf16.msra.mxu0 0
        %558 = vmatprep.subr.bf16.mxu0 0
        %559 = vmatpush2.bf16.msra.mxu0 0
        %560 = vmatprep.subr.bf16.mxu0 0
        %561 = vmatpush2.bf16.msra.mxu0 0
        %562 = vmatprep.subr.bf16.mxu0 0
        %563 = vmatpush2.bf16.msra.mxu0 0
        %564 = vmatprep.subr.bf16.mxu0 0
        %565 = vmatpush2.bf16.msra.mxu0 0
        %566 = vmatprep.subr.bf16.mxu0 0
        %567 = vmatpush2.bf16.msra.mxu0 0
        %568 = vmatprep.mubr.bf16.mxu0 0
        %569 = vmatmul.mubr.bf16.gmra.mxu0 %v531
        %v570 = vpop.f32.mrf.mxu0
        %v571 = vadd.f32 %v503, %v570
        %v572 = vpop.f32.mrf.mxu0
        %v573 = vpop.f32.mrf.mxu0
        %v574 = vadd.f32 %v508, %v573
        %v575 = vpop.f32.mrf.mxu0
        %576 = vmatprep.mubr.bf16.mxu0 0
        %577 = vmatmul.mubr.bf16.gmra.mxu0 %v534
        %v578 = vpop.f32.mrf.mxu0
        %v579 = vadd.f32 %v513, %v578
        %v580 = vpop.f32.mrf.mxu0
        %v581 = vpop.f32.mrf.mxu0
        %v582 = vadd.f32 %v518, %v581
        %v583 = vpop.f32.mrf.mxu0
        %584 = vdwg.mxu0
        %v585 = vmax.f32 %v571, 0.0
        %v586 = vmax.f32 %v574, 0.0
        %v587 = vmax.f32 %v579, 0.0
        %v588 = vmax.f32 %v582, 0.0
        %s589 = scalar_lea.vmem %s2, 16
        %v590 = vld [vmem:[%s589] sm:$0xf]
        %v591 = vld [vmem:[%s589 + $0x4] sm:$0xf]
        %v592 = vld [vmem:[%s589 + $0x8] sm:$0xf]
        %v593 = vld [vmem:[%s589 + $0xc] sm:$0xf]
        %v594 = vpack.c.bf16 %v586, %v585
        %v595 = vpack.c.bf16 %v588, %v587
        %s596 = scalar_lea.vmem %s3, 96
        %v597 = vld [vmem:[%s596] sm:$0xff]
        %v598 = vld [vmem:[%s596 + $0x8] sm:$0xff]
        %v599 = vld [vmem:[%s596 + $0x10] sm:$0xff]
        %v600 = vld [vmem:[%s596 + $0x18] sm:$0xff]
        %602 = vset.pattern.permute.xlu0 0
        %603 = vperm.xlu0 %602, %v597
        %v604 = vpop.permute.xlu0 %603
        %607 = vset.pattern.permute.xlu0 0
        %608 = vperm.xlu0 %607, %v598
        %v609 = vpop.permute.xlu0 %608
        %612 = vset.pattern.permute.xlu0 0
        %613 = vperm.xlu0 %612, %v599
        %v614 = vpop.permute.xlu0 %613
        %617 = vset.pattern.permute.xlu0 0
        %618 = vperm.xlu0 %617, %v600
        %v619 = vpop.permute.xlu0 %618
        %v625 = vunpack.c.l.b16 %v590
        %v626 = vunpack.c.l.b16 %v591
        %v627 = vunpack.c.l.b16 %v592
        %v628 = vunpack.c.l.b16 %v593
        %v629 = vpack.c.b16 %v626, %v625
        %v630 = vpack.c.b16 %v628, %v627
        %v632 = vsel %vm328, %v629, 0
        %v635 = vsel %vm328, %v630, 0
        %637 = vmatprep.subr.bf16.mxu0 0
        %638 = vmatpush1.bf16.msra.mxu0 0
        %639 = vmatprep.subr.bf16.mxu0 0
        %640 = vmatpush1.bf16.msra.mxu0 0
        %641 = vmatprep.subr.bf16.mxu0 0
        %642 = vmatpush1.bf16.msra.mxu0 0
        %643 = vmatprep.subr.bf16.mxu0 0
        %644 = vmatpush1.bf16.msra.mxu0 0
        %645 = vmatprep.subr.bf16.mxu0 0
        %646 = vmatpush1.bf16.msra.mxu0 0
        %647 = vmatprep.subr.bf16.mxu0 0
        %648 = vmatpush1.bf16.msra.mxu0 0
        %649 = vmatprep.subr.bf16.mxu0 0
        %650 = vmatpush1.bf16.msra.mxu0 %v595
        %651 = vmatprep.subr.bf16.mxu0 0
        %652 = vmatpush1.bf16.msra.mxu0 %v594
        %653 = vmatprep.subr.bf16.mxu0 0
        %654 = vmatpush2.bf16.msra.mxu0 0
        %655 = vmatprep.subr.bf16.mxu0 0
        %656 = vmatpush2.bf16.msra.mxu0 0
        %657 = vmatprep.subr.bf16.mxu0 0
        %658 = vmatpush2.bf16.msra.mxu0 0
        %659 = vmatprep.subr.bf16.mxu0 0
        %660 = vmatpush2.bf16.msra.mxu0 0
        %661 = vmatprep.subr.bf16.mxu0 0
        %662 = vmatpush2.bf16.msra.mxu0 0
        %663 = vmatprep.subr.bf16.mxu0 0
        %664 = vmatpush2.bf16.msra.mxu0 0
        %665 = vmatprep.subr.bf16.mxu0 0
        %666 = vmatpush2.bf16.msra.mxu0 0
        %667 = vmatprep.subr.bf16.mxu0 0
        %668 = vmatpush2.bf16.msra.mxu0 0
        %669 = vmatprep.mubr.bf16.mxu0 0
        %670 = vmatmul.mubr.bf16.gmra.mxu0 %v632
        %v671 = vpop.f32.mrf.mxu0
        %v672 = vadd.f32 %v604, %v671
        %v673 = vpop.f32.mrf.mxu0
        %v674 = vpop.f32.mrf.mxu0
        %v675 = vadd.f32 %v609, %v674
        %v676 = vpop.f32.mrf.mxu0
        %677 = vmatprep.mubr.bf16.mxu0 0
        %678 = vmatmul.mubr.bf16.gmra.mxu0 %v635
        %v679 = vpop.f32.mrf.mxu0
        %v680 = vadd.f32 %v614, %v679
        %v681 = vpop.f32.mrf.mxu0
        %v682 = vpop.f32.mrf.mxu0
        %v683 = vadd.f32 %v619, %v682
        %v684 = vpop.f32.mrf.mxu0
        %685 = vdwg.mxu0
        %v686 = vadd.f32 %v484, %v672
        %v687 = vadd.f32 %v485, %v675
        %v688 = vadd.f32 %v486, %v680
        %v689 = vadd.f32 %v487, %v683
        %s690 = scalar_lea.vmem %s1, 32
        %v691 = vld [vmem:[%s690] sm:$0xf]
        %v692 = vld [vmem:[%s690 + $0x4] sm:$0xf]
        %v693 = vld [vmem:[%s690 + $0x8] sm:$0xf]
        %v694 = vld [vmem:[%s690 + $0xc] sm:$0xf]
        %v695 = vpack.c.bf16 %v687, %v686
        %v696 = vpack.c.bf16 %v689, %v688
        %s697 = scalar_lea.vmem %s3, 128
        %v698 = vld [vmem:[%s697] sm:$0xff]
        %v699 = vld [vmem:[%s697 + $0x8] sm:$0xff]
        %v700 = vld [vmem:[%s697 + $0x10] sm:$0xff]
        %v701 = vld [vmem:[%s697 + $0x18] sm:$0xff]
        %703 = vset.pattern.permute.xlu0 0
        %704 = vperm.xlu0 %703, %v698
        %v705 = vpop.permute.xlu0 %704
        %708 = vset.pattern.permute.xlu0 0
        %709 = vperm.xlu0 %708, %v699
        %v710 = vpop.permute.xlu0 %709
        %713 = vset.pattern.permute.xlu0 0
        %714 = vperm.xlu0 %713, %v700
        %v715 = vpop.permute.xlu0 %714
        %718 = vset.pattern.permute.xlu0 0
        %719 = vperm.xlu0 %718, %v701
        %v720 = vpop.permute.xlu0 %719
        %v726 = vunpack.c.l.b16 %v691
        %v727 = vunpack.c.l.b16 %v692
        %v728 = vunpack.c.l.b16 %v693
        %v729 = vunpack.c.l.b16 %v694
        %v730 = vpack.c.b16 %v727, %v726
        %v731 = vpack.c.b16 %v729, %v728
        %v733 = vsel %vm328, %v730, 0
        %v736 = vsel %vm328, %v731, 0
        %738 = vmatprep.subr.bf16.mxu0 0
        %739 = vmatpush1.bf16.msra.mxu0 0
        %740 = vmatprep.subr.bf16.mxu0 0
        %741 = vmatpush1.bf16.msra.mxu0 0
        %742 = vmatprep.subr.bf16.mxu0 0
        %743 = vmatpush1.bf16.msra.mxu0 0
        %744 = vmatprep.subr.bf16.mxu0 0
        %745 = vmatpush1.bf16.msra.mxu0 0
        %746 = vmatprep.subr.bf16.mxu0 0
        %747 = vmatpush1.bf16.msra.mxu0 0
        %748 = vmatprep.subr.bf16.mxu0 0
        %749 = vmatpush1.bf16.msra.mxu0 0
        %750 = vmatprep.subr.bf16.mxu0 0
        %751 = vmatpush1.bf16.msra.mxu0 %v696
        %752 = vmatprep.subr.bf16.mxu0 0
        %753 = vmatpush1.bf16.msra.mxu0 %v695
        %754 = vmatprep.subr.bf16.mxu0 0
        %755 = vmatpush2.bf16.msra.mxu0 0
        %756 = vmatprep.subr.bf16.mxu0 0
        %757 = vmatpush2.bf16.msra.mxu0 0
        %758 = vmatprep.subr.bf16.mxu0 0
        %759 = vmatpush2.bf16.msra.mxu0 0
        %760 = vmatprep.subr.bf16.mxu0 0
        %761 = vmatpush2.bf16.msra.mxu0 0
        %762 = vmatprep.subr.bf16.mxu0 0
        %763 = vmatpush2.bf16.msra.mxu0 0
        %764 = vmatprep.subr.bf16.mxu0 0
        %765 = vmatpush2.bf16.msra.mxu0 0
        %766 = vmatprep.subr.bf16.mxu0 0
        %767 = vmatpush2.bf16.msra.mxu0 0
        %768 = vmatprep.subr.bf16.mxu0 0
        %769 = vmatpush2.bf16.msra.mxu0 0
        %770 = vmatprep.mubr.bf16.mxu0 0
        %771 = vmatmul.mubr.bf16.gmra.mxu0 %v733
        %v772 = vpop.f32.mrf.mxu0
        %v773 = vadd.f32 %v705, %v772
        %v774 = vpop.f32.mrf.mxu0
        %v775 = vpop.f32.mrf.mxu0
        %v776 = vadd.f32 %v710, %v775
        %v777 = vpop.f32.mrf.mxu0
        %778 = vmatprep.mubr.bf16.mxu0 0
        %779 = vmatmul.mubr.bf16.gmra.mxu0 %v736
        %v780 = vpop.f32.mrf.mxu0
        %v781 = vadd.f32 %v715, %v780
        %v782 = vpop.f32.mrf.mxu0
        %v783 = vpop.f32.mrf.mxu0
        %v784 = vadd.f32 %v720, %v783
        %v785 = vpop.f32.mrf.mxu0
        %786 = vdwg.mxu0
        %v787 = vmax.f32 %v773, 0.0
        %v788 = vmax.f32 %v776, 0.0
        %v789 = vmax.f32 %v781, 0.0
        %v790 = vmax.f32 %v784, 0.0
        %s791 = scalar_lea.vmem %s2, 32
        %v792 = vld [vmem:[%s791] sm:$0xf]
        %v793 = vld [vmem:[%s791 + $0x4] sm:$0xf]
        %v794 = vld [vmem:[%s791 + $0x8] sm:$0xf]
        %v795 = vld [vmem:[%s791 + $0xc] sm:$0xf]
        %v796 = vpack.c.bf16 %v788, %v787
        %v797 = vpack.c.bf16 %v790, %v789
        %s798 = scalar_lea.vmem %s3, 160
        %v799 = vld [vmem:[%s798] sm:$0xff]
        %v800 = vld [vmem:[%s798 + $0x8] sm:$0xff]
        %v801 = vld [vmem:[%s798 + $0x10] sm:$0xff]
        %v802 = vld [vmem:[%s798 + $0x18] sm:$0xff]
        %804 = vset.pattern.permute.xlu0 0
        %805 = vperm.xlu0 %804, %v799
        %v806 = vpop.permute.xlu0 %805
        %809 = vset.pattern.permute.xlu0 0
        %810 = vperm.xlu0 %809, %v800
        %v811 = vpop.permute.xlu0 %810
        %814 = vset.pattern.permute.xlu0 0
        %815 = vperm.xlu0 %814, %v801
        %v816 = vpop.permute.xlu0 %815
        %819 = vset.pattern.permute.xlu0 0
        %820 = vperm.xlu0 %819, %v802
        %v821 = vpop.permute.xlu0 %820
        %v827 = vunpack.c.l.b16 %v792
        %v828 = vunpack.c.l.b16 %v793
        %v829 = vunpack.c.l.b16 %v794
        %v830 = vunpack.c.l.b16 %v795
        %v831 = vpack.c.b16 %v828, %v827
        %v832 = vpack.c.b16 %v830, %v829
        %v834 = vsel %vm328, %v831, 0
        %v837 = vsel %vm328, %v832, 0
        %839 = vmatprep.subr.bf16.mxu0 0
        %840 = vmatpush1.bf16.msra.mxu0 0
        %841 = vmatprep.subr.bf16.mxu0 0
        %842 = vmatpush1.bf16.msra.mxu0 0
        %843 = vmatprep.subr.bf16.mxu0 0
        %844 = vmatpush1.bf16.msra.mxu0 0
        %845 = vmatprep.subr.bf16.mxu0 0
        %846 = vmatpush1.bf16.msra.mxu0 0
        %847 = vmatprep.subr.bf16.mxu0 0
        %848 = vmatpush1.bf16.msra.mxu0 0
        %849 = vmatprep.subr.bf16.mxu0 0
        %850 = vmatpush1.bf16.msra.mxu0 0
        %851 = vmatprep.subr.bf16.mxu0 0
        %852 = vmatpush1.bf16.msra.mxu0 %v797
        %853 = vmatprep.subr.bf16.mxu0 0
        %854 = vmatpush1.bf16.msra.mxu0 %v796
        %855 = vmatprep.subr.bf16.mxu0 0
        %856 = vmatpush2.bf16.msra.mxu0 0
        %857 = vmatprep.subr.bf16.mxu0 0
        %858 = vmatpush2.bf16.msra.mxu0 0
        %859 = vmatprep.subr.bf16.mxu0 0
        %860 = vmatpush2.bf16.msra.mxu0 0
        %861 = vmatprep.subr.bf16.mxu0 0
        %862 = vmatpush2.bf16.msra.mxu0 0
        %863 = vmatprep.subr.bf16.mxu0 0
        %864 = vmatpush2.bf16.msra.mxu0 0
        %865 = vmatprep.subr.bf16.mxu0 0
        %866 = vmatpush2.bf16.msra.mxu0 0
        %867 = vmatprep.subr.bf16.mxu0 0
        %868 = vmatpush2.bf16.msra.mxu0 0
        %869 = vmatprep.subr.bf16.mxu0 0
        %870 = vmatpush2.bf16.msra.mxu0 0
        %871 = vmatprep.mubr.bf16.mxu0 0
        %872 = vmatmul.mubr.bf16.gmra.mxu0 %v834
        %v873 = vpop.f32.mrf.mxu0
        %v874 = vadd.f32 %v806, %v873
        %v875 = vpop.f32.mrf.mxu0
        %v876 = vpop.f32.mrf.mxu0
        %v877 = vadd.f32 %v811, %v876
        %v878 = vpop.f32.mrf.mxu0
        %879 = vmatprep.mubr.bf16.mxu0 0
        %880 = vmatmul.mubr.bf16.gmra.mxu0 %v837
        %v881 = vpop.f32.mrf.mxu0
        %v882 = vadd.f32 %v816, %v881
        %v883 = vpop.f32.mrf.mxu0
        %v884 = vpop.f32.mrf.mxu0
        %v885 = vadd.f32 %v821, %v884
        %v886 = vpop.f32.mrf.mxu0
        %887 = vdwg.mxu0
        %v888 = vadd.f32 %v686, %v874
        %v889 = vadd.f32 %v687, %v877
        %v890 = vadd.f32 %v688, %v882
        %v891 = vadd.f32 %v689, %v885
        %v892 = vpack.c.bf16 %v889, %v888
        %v893 = vpack.c.bf16 %v891, %v890
        %v896 = vunpack.c.l.b16 %v892
        %v897 = vunpack.c.h.b16 %v892
        %v898 = vunpack.c.l.b16 %v893
        %v899 = vunpack.c.h.b16 %v893
        %v900 = vpack.c.b16 %v896, %v896
        %v901 = vpack.c.b16 %v897, %v897
        %v902 = vpack.c.b16 %v898, %v898
        %v903 = vpack.c.b16 %v899, %v899
        %908 = vst [vmem:[%s268] sm:$0xf] %v900
        %909 = vst [vmem:[%s268 + $0x4] sm:$0xf] %v901
        %910 = vst [vmem:[%s268 + $0x8] sm:$0xf] %v902
        %911 = vst [vmem:[%s268 + $0xc] sm:$0xf] %v903
        %s912 = sand.u32 %s131, 1
        %s913 = scalar_lea.sflag [#allocation4], %s912
        %s914 = sand.u32 %s131, 1
        %s915 = smul.addr %s914, 16
        %s916 = scalar_lea.vmem [#allocation3], %s915
        // Predicated region
        $region78: #{tpu_custom_call.1} parent=72 // pred_check
          %p917 = pneg %p141
        $region79: #{tpu_custom_call.1} parent=72 // pred_check_branch
          %919 = sbr.rel (%p917) target = $region81
        $region80: #{tpu_custom_call.1} parent=72 // pred_region
          %s921 = ssub.s32 256, 256
          %922 = vsyncadd %s913, %s921
          %s923 = smul.addr %s22, 8
          %s924 = sadd.s32 %s23, %s923
          %s925 = smul.addr %s924, 64
          %s926 = scalar_lea.hbm %s4, %s925
          %s927 = sshll.u32 %s916, 4
          %s928 = int_to_ptr.vmem [resolvable:$true] %s927
          %933 = dma.vmem_to_hbm [thread:$0]  %s928, 256, %s926, %s913, 64, 128, 4
        $region81: #{tpu_custom_call.1} parent=72 // pred_fallthru
          _
      $region73: #{tpu_custom_call.1} parent=5 // pred_fallthru
        _
      %p934 = scmp.le.s32.totalorder 2, %s13
      // Predicated region
      $region82: #{tpu_custom_call.1} parent=5 // pred_check
        %p935 = pneg %p934
      $region83: #{tpu_custom_call.1} parent=5 // pred_check_branch
        %937 = sbr.rel (%p935) target = $region85
      $region84: #{tpu_custom_call.1} parent=5 // pred_region
        %s938 = ssub.s32 %s13, 2
        // Predicated region
        $region86: #{tpu_custom_call.1} parent=84 // pred_check
          %p939 = pneg %p147
        $region87: #{tpu_custom_call.1} parent=84 // pred_check_branch
          %941 = sbr.rel (%p939) target = $region89
        $region88: #{tpu_custom_call.1} parent=84 // pred_region
          %s942 = sand.u32 %s132, 1
          %s943 = scalar_lea.sflag [#allocation4], %s942
          %s944 = sand.u32 %s132, 1
          %s945 = smul.addr %s944, 16
          %s946 = scalar_lea.vmem [#allocation3], %s945
          %947 = dma.done %s943, 256
        $region89: #{tpu_custom_call.1} parent=84 // pred_fallthru
          _
      $region85: #{tpu_custom_call.1} parent=5 // pred_fallthru
        _
    $region6: #{tpu_custom_call.1} parent=1 // loop_footer
      %s17 = sadd.s32 1, %s13
    $region7: #{tpu_custom_call.1} parent=1 // loop_footer_branch
      %12 = sbr.rel target = $region3
    $region8: #{tpu_custom_call.1} parent=1 // loop_exit
      _
    %948 = vsyncpa [#allocation4], 1
    %s949 = scalar_lea.sflag [#allocation4], 1
    %950 = vsyncpa %s949, 1

</llo_original>
